<compile_context>
chip_gen: v7x
topology: tpu7x:2x2x1
jax: 0.10.0
libtpu: 0.0.40
codegen_flags: <defaults>
</compile_context>

<pallas_src>
import functools

import jax
import jax.numpy as jnp
from jax import lax
from jax.experimental import pallas as pl
from jax.experimental.pallas import tpu as pltpu

EPS = 1e-5


def _conv_in_relu_kernel(x_ref, w_ref, o_ref, s1_scr, s2_scr, *,
                         tile_h, n_t, h_out, w_out, c_in, kh, kw, eps):
    """One (sample, row-tile) grid step.

    x_ref : (1, Hp, Wp, C_in)        bf16  reflect-padded input, resident per sample
    w_ref : (kh*kw*C_in, C_pad)      bf16  fused conv weights (resident)
    o_ref : (1, H_out*W_out, C_pad)  f32   per-sample output block (resident over t)
    s1/s2 : (1, C_pad)               f32   running sum / sum-of-squares
    """
    t = pl.program_id(1)
    tile_m = tile_h * w_out
    hw = h_out * w_out
    halo = kh - 1

    # Halo row-tile of the padded input for this step (one dynamic VMEM load).
    row0 = pl.multiple_of(t * tile_h, tile_h)
    xt = x_ref[0, pl.ds(row0, tile_h + halo), :, :]        # (tile_h+halo, Wp, C_in)

    # Build the (tile_m, kh*kw*C_in) patch matrix from shifted views and run a
    # single fused-K MXU matmul (instead of kh*kw accumulating K=C_in dots).
    wins = []
    for di in range(kh):
        for dj in range(kw):
            wins.append(xt[di:di + tile_h, dj:dj + w_out, :])   # (tile_h, W_out, C_in)
    patches = jnp.concatenate(wins, axis=-1).reshape(tile_m, kh * kw * c_in)
    acc = jnp.dot(patches, w_ref[...], preferred_element_type=jnp.float32)

    # Init running stats on the first tile of each sample.
    @pl.when(t == 0)
    def _():
        s1_scr[...] = jnp.zeros_like(s1_scr)
        s2_scr[...] = jnp.zeros_like(s2_scr)

    # Fused single-pass stats (f32).
    # TODO(synk): switch to shifted / Welford accumulation if E[y^2]-E[y]^2
    # cancellation becomes visible at large HW.
    s1_scr[...] += jnp.sum(acc, axis=0, keepdims=True)
    s2_scr[...] += jnp.sum(acc * acc, axis=0, keepdims=True)

    # Store the un-normalized tile straight into the resident output block.
    out0 = pl.multiple_of(t * tile_m, 8)
    o_ref[0, pl.ds(out0, tile_m), :] = acc

    # Finalize: normalize (biased variance) + ReLU in place, chunked per row
    # tile so vreg live ranges stay small.  Layout stays (HW, C_pad); the
    # NCHW transpose is done in XLA after the call.
    @pl.when(t == n_t - 1)
    def _():
        inv_hw = jnp.float32(1.0 / hw)
        mean = s1_scr[...] * inv_hw                        # (1, C_pad)
        var = s2_scr[...] * inv_hw - mean * mean
        scale = lax.rsqrt(var + eps)
        for i in range(n_t):
            lo, hi = i * tile_m, (i + 1) * tile_m
            y = o_ref[0, lo:hi, :]
            o_ref[0, lo:hi, :] = jnp.maximum((y - mean) * scale, 0.0)


def _pick_tile_h(h_out, w_out, max_m=2048):
    """Largest divisor of h_out with tile_m = tile_h*w_out <= max_m, % 8 == 0."""
    divs = [d for d in range(1, h_out + 1) if h_out % d == 0]
    aligned = [d for d in divs if (d * w_out) % 8 == 0]
    if not aligned:
        return h_out                      # single tile; full-slab store only
    fitting = [d for d in aligned if d * w_out <= max_m]
    return max(fitting) if fitting else min(aligned)


def conv_block_gen(x, weight, bias=None, *, stride=1, padding=1, tile_h=None):
    """Conv2d(reflect pad) -> InstanceNorm2d -> ReLU.

    x: (N, C_in, H, W) NCHW.  weight: (C_out, C_in, KH, KW).  bias is accepted
    for API parity but ignored: a per-channel constant bias is exactly
    cancelled by InstanceNorm's mean subtraction.
    Returns (N, C_out, H_out, W_out) float32 in NCHW (same as PyTorch).
    """
    del bias  # exact no-op under InstanceNorm (mean subtraction cancels it)
    n, c_in, h, w = x.shape
    c_out, c_in_w, kh, kw = weight.shape
    assert c_in == c_in_w
    assert stride == 1, "kernel implements the stride-1 reflect-pad conv block"
    assert h > padding and w > padding, "reflect padding needs H, W > padding"

    h_out = h + 2 * padding - kh + 1
    w_out = w + 2 * padding - kw + 1
    hw = h_out * w_out
    hp, wp = h + 2 * padding, w + 2 * padding

    valid = (tile_h is not None and h_out % tile_h == 0 and
             ((tile_h * w_out) % 8 == 0 or tile_h == h_out))
    if not valid:
        tile_h = _pick_tile_h(h_out, w_out)
    n_t = h_out // tile_h

    k_dim = kh * kw * c_in
    # Lane-dense output channels (pad C_out up to a multiple of 128).
    # TODO(synk): on v6e/v7x consider padding to 256 when C_out >= 256.
    c_pad = pl.cdiv(c_out, 128) * 128

    # Glue: reflect pad, NHWC, bf16.  No halo duplication in HBM — the padded
    # per-sample input stays resident in VMEM and row tiles are sliced inside
    # the kernel.
    x_pad = jnp.pad(x, ((0, 0), (0, 0), (padding, padding), (padding, padding)),
                    mode="reflect")
    x_nhwc = jnp.transpose(x_pad, (0, 2, 3, 1)).astype(jnp.bfloat16)

    # Weights: (C_out, C_in, KH, KW) -> (KH*KW*C_in, C_pad) for the fused-K
    # matmul; padded channels produce zeros and are sliced off after the call.
    w_mat = jnp.transpose(weight, (2, 3, 1, 0)).reshape(k_dim, c_out)
    w_mat = jnp.pad(w_mat, ((0, 0), (0, c_pad - c_out))).astype(jnp.bfloat16)

    kernel = functools.partial(
        _conv_in_relu_kernel, tile_h=tile_h, n_t=n_t, h_out=h_out, w_out=w_out,
        c_in=c_in, kh=kh, kw=kw, eps=EPS)

    # Shape-derived scoped-VMEM budget: double-buffered blocks + scratch + slack.
    in_bytes = hp * wp * c_in * 2
    w_bytes = k_dim * c_pad * 2
    out_bytes = hw * c_pad * 4
    vmem_limit = int(min(max(2 * (in_bytes + w_bytes + out_bytes) + (8 << 20),
                             32 << 20), 100 << 20))

    out = pl.pallas_call(
        kernel,
        out_shape=jax.ShapeDtypeStruct((n, hw, c_pad), jnp.float32),
        grid_spec=pltpu.PrefetchScalarGridSpec(
            num_scalar_prefetch=0,
            grid=(n, n_t),
            in_specs=[
                pl.BlockSpec((1, hp, wp, c_in), lambda b, t: (b, 0, 0, 0)),
                pl.BlockSpec((k_dim, c_pad), lambda b, t: (0, 0)),
            ],
            out_specs=pl.BlockSpec((1, hw, c_pad), lambda b, t: (b, 0, 0)),
            scratch_shapes=[
                pltpu.VMEM((1, c_pad), jnp.float32),    # sum(y)
                pltpu.VMEM((1, c_pad), jnp.float32),    # sum(y*y)
            ],
        ),
        compiler_params=pltpu.CompilerParams(
            dimension_semantics=("parallel", "arbitrary"),
            vmem_limit_bytes=vmem_limit,
        ),
    )(x_nhwc, w_mat)

    # (N, HW, C_pad) -> drop channel padding -> NCHW (transpose done in XLA).
    out = out[:, :, :c_out].reshape(n, h_out, w_out, c_out)
    return jnp.transpose(out, (0, 3, 1, 2))


def _reference(x, weight, bias, *, stride=1, padding=1, cast_bf16=False):
    # Pure-JAX reference (includes the bias, to verify it truly cancels).
    x_pad = jnp.pad(x, ((0, 0), (0, 0), (padding, padding), (padding, padding)),
                    mode="reflect")
    if cast_bf16:
        x_pad = x_pad.astype(jnp.bfloat16).astype(jnp.float32)
        weight = weight.astype(jnp.bfloat16).astype(jnp.float32)
    y = lax.conv_general_dilated(
        x_pad, weight, window_strides=(stride, stride), padding="VALID",
        dimension_numbers=("NCHW", "OIHW", "NCHW"))
    y = y + bias.reshape(1, -1, 1, 1)
    mean = jnp.mean(y, axis=(2, 3), keepdims=True)
    var = jnp.mean((y - mean) ** 2, axis=(2, 3), keepdims=True)
    y = (y - mean) * lax.rsqrt(var + EPS)
    return jnp.maximum(y, 0.0)


if __name__ == "__main__":
    key = jax.random.PRNGKey(0)
    k_x, k_w, k_b = jax.random.split(key, 3)

    N, C_IN, C_OUT, H, W = 2, 4, 8, 16, 16
    KH = KW = 3

    x = jax.random.normal(k_x, (N, C_IN, H, W), dtype=jnp.float32)
    weight = 0.1 * jax.random.normal(k_w, (C_OUT, C_IN, KH, KW), dtype=jnp.float32)
    bias = 0.1 * jax.random.normal(k_b, (C_OUT,), dtype=jnp.float32)

    ref_bf16 = _reference(x, weight, bias, padding=1, cast_bf16=True)
    ref_f32 = _reference(x, weight, bias, padding=1, cast_bf16=False)

    # Exercise both the single-tile (auto) and multi-tile stats-accumulation paths.
    for th in (None, 4):
        out = conv_block_gen(x, weight, bias, stride=1, padding=1, tile_h=th)
        out = jax.block_until_ready(out)
        assert out.shape == (N, C_OUT, H, W)

        # Strict check vs. a reference driven by the same bf16-cast conv inputs.
        assert jnp.allclose(out, ref_bf16, atol=5e-3, rtol=5e-3), float(
            jnp.max(jnp.abs(out - ref_bf16)))
        # Sanity check vs. the full-f32 reference (bf16 matmul inputs -> looser tol).
        assert jnp.allclose(out, ref_f32, atol=5e-2, rtol=5e-2), float(
            jnp.max(jnp.abs(out - ref_f32)))

    print("KERNEL_OK")
</pallas_src>

<mosaic_0001>
module attributes {stable_mosaic.version = 11 : i64} {
  func.func @_conv_in_relu_kernel(%arg0: i32, %arg1: i32, %arg2: memref<1x18x18x4xbf16, #tpu.memory_space<vmem>>, %arg3: memref<36x128xbf16, #tpu.memory_space<vmem>>, %arg4: memref<1x256x128xf32, #tpu.memory_space<vmem>>, %arg5: memref<1x128xf32, #tpu.memory_space<vmem>>, %arg6: memref<1x128xf32, #tpu.memory_space<vmem>>) attributes {dimension_semantics = [#tpu.dimension_semantics<parallel>, #tpu.dimension_semantics<arbitrary>], iteration_bounds = array<i64: 2, 1>, scalar_prefetch = 0 : i64, scratch_operands = 2 : i64, tpu.core_type = #tpu.core_type<tc>, window_params = [{transform_indices = @transform_0, window_bounds = array<i64: 1, 18, 18, 4>}, {pipeline_mode = #tpu.pipeline_mode<synchronous>, transform_indices = @transform_1, window_bounds = array<i64: 36, 128>}, {transform_indices = @transform_2, window_bounds = array<i64: 1, 256, 128>}]} {
    %c16_i32 = arith.constant 16 : i32
    %0 = arith.muli %arg1, %c16_i32 : i32
    %1 = tpu.assume_multiple %0, 16 : i32
    %c0 = arith.constant 0 : index
    %2 = arith.index_cast %1 : i32 to index
    %c0_0 = arith.constant 0 : index
    %c0_1 = arith.constant 0 : index
    %3 = vector.load %arg2[%c0, %2, %c0_0, %c0_1] : memref<1x18x18x4xbf16, #tpu.memory_space<vmem>>, vector<1x18x18x4xbf16>
    %4 = vector.shape_cast %3 : vector<1x18x18x4xbf16> to vector<18x18x4xbf16>
    %5 = vector.extract_strided_slice %4 {offsets = [0, 0, 0], sizes = [16, 16, 4], strides = [1, 1, 1]} : vector<18x18x4xbf16> to vector<16x16x4xbf16>
    %6 = vector.extract_strided_slice %4 {offsets = [0, 1, 0], sizes = [16, 16, 4], strides = [1, 1, 1]} : vector<18x18x4xbf16> to vector<16x16x4xbf16>
    %7 = vector.extract_strided_slice %4 {offsets = [0, 2, 0], sizes = [16, 16, 4], strides = [1, 1, 1]} : vector<18x18x4xbf16> to vector<16x16x4xbf16>
    %8 = vector.extract_strided_slice %4 {offsets = [1, 0, 0], sizes = [16, 16, 4], strides = [1, 1, 1]} : vector<18x18x4xbf16> to vector<16x16x4xbf16>
    %9 = vector.extract_strided_slice %4 {offsets = [1, 1, 0], sizes = [16, 16, 4], strides = [1, 1, 1]} : vector<18x18x4xbf16> to vector<16x16x4xbf16>
    %10 = vector.extract_strided_slice %4 {offsets = [1, 2, 0], sizes = [16, 16, 4], strides = [1, 1, 1]} : vector<18x18x4xbf16> to vector<16x16x4xbf16>
    %11 = vector.extract_strided_slice %4 {offsets = [2, 0, 0], sizes = [16, 16, 4], strides = [1, 1, 1]} : vector<18x18x4xbf16> to vector<16x16x4xbf16>
    %12 = vector.extract_strided_slice %4 {offsets = [2, 1, 0], sizes = [16, 16, 4], strides = [1, 1, 1]} : vector<18x18x4xbf16> to vector<16x16x4xbf16>
    %13 = vector.extract_strided_slice %4 {offsets = [2, 2, 0], sizes = [16, 16, 4], strides = [1, 1, 1]} : vector<18x18x4xbf16> to vector<16x16x4xbf16>
    %14 = tpu.concatenate %5, %6, %7, %8, %9, %10, %11, %12, %13 in 2 : vector<16x16x4xbf16>, vector<16x16x4xbf16>, vector<16x16x4xbf16>, vector<16x16x4xbf16>, vector<16x16x4xbf16>, vector<16x16x4xbf16>, vector<16x16x4xbf16>, vector<16x16x4xbf16>, vector<16x16x4xbf16> -> vector<16x16x36xbf16>
    %15 = vector.shape_cast %14 : vector<16x16x36xbf16> to vector<256x36xbf16>
    %c0_2 = arith.constant 0 : index
    %c0_3 = arith.constant 0 : index
    %16 = vector.load %arg3[%c0_2, %c0_3] : memref<36x128xbf16, #tpu.memory_space<vmem>>, vector<36x128xbf16>
    %cst = arith.constant dense<0.000000e+00> : vector<256x128xf32>
    %17 = tpu.matmul %15, %16, %cst {dimension_numbers = #tpu.dot_dimension_numbers<[1], [0], [0], [1], [0, 0, 1, 1], [], []>} : vector<256x36xbf16>, vector<36x128xbf16>, vector<256x128xf32> -> vector<256x128xf32>
    %c0_i32 = arith.constant 0 : i32
    %18 = arith.cmpi eq, %arg1, %c0_i32 : i32
    %19 = arith.extui %18 : i1 to i32
    %c0_i32_4 = arith.constant 0 : i32
    %20 = arith.cmpi ne, %19, %c0_i32_4 : i32
    scf.if %20 {
      %cst_19 = arith.constant 0.000000e+00 : f32
      %41 = vector.broadcast %cst_19 : f32 to vector<1x128xf32>
      %c0_20 = arith.constant 0 : index
      %c0_21 = arith.constant 0 : index
      %42 = vector.load %arg5[%c0_20, %c0_21] : memref<1x128xf32, #tpu.memory_space<vmem>>, vector<1x128xf32>
      tpu.vector_store %arg5[%c0_20, %c0_21], %41 {strides = array<i32>} : memref<1x128xf32, #tpu.memory_space<vmem>>, vector<1x128xf32>,
      %cst_22 = arith.constant 0.000000e+00 : f32
      %43 = vector.broadcast %cst_22 : f32 to vector<1x128xf32>
      %c0_23 = arith.constant 0 : index
      %c0_24 = arith.constant 0 : index
      %44 = vector.load %arg6[%c0_23, %c0_24] : memref<1x128xf32, #tpu.memory_space<vmem>>, vector<1x128xf32>
      tpu.vector_store %arg6[%c0_23, %c0_24], %43 {strides = array<i32>} : memref<1x128xf32, #tpu.memory_space<vmem>>, vector<1x128xf32>,
    } else {
    }
    %c0_5 = arith.constant 0 : index
    %c0_6 = arith.constant 0 : index
    %21 = vector.load %arg5[%c0_5, %c0_6] : memref<1x128xf32, #tpu.memory_space<vmem>>, vector<1x128xf32>
    %cst_7 = arith.constant dense<0.000000e+00> : vector<128xf32>
    %22 = vector.multi_reduction <add>, %17, %cst_7 [0] : vector<256x128xf32> to vector<128xf32>
    %23 = vector.shape_cast %22 : vector<128xf32> to vector<1x128xf32>
    %24 = arith.addf %21, %23 : vector<1x128xf32>
    %c0_8 = arith.constant 0 : index
    %c0_9 = arith.constant 0 : index
    %25 = vector.load %arg5[%c0_8, %c0_9] : memref<1x128xf32, #tpu.memory_space<vmem>>, vector<1x128xf32>
    tpu.vector_store %arg5[%c0_8, %c0_9], %24 {strides = array<i32>} : memref<1x128xf32, #tpu.memory_space<vmem>>, vector<1x128xf32>,
    %c0_10 = arith.constant 0 : index
    %c0_11 = arith.constant 0 : index
    %26 = vector.load %arg6[%c0_10, %c0_11] : memref<1x128xf32, #tpu.memory_space<vmem>>, vector<1x128xf32>
    %27 = arith.mulf %17, %17 : vector<256x128xf32>
    %cst_12 = arith.constant dense<0.000000e+00> : vector<128xf32>
    %28 = vector.multi_reduction <add>, %27, %cst_12 [0] : vector<256x128xf32> to vector<128xf32>
    %29 = vector.shape_cast %28 : vector<128xf32> to vector<1x128xf32>
    %30 = arith.addf %26, %29 : vector<1x128xf32>
    %c0_13 = arith.constant 0 : index
    %c0_14 = arith.constant 0 : index
    %31 = vector.load %arg6[%c0_13, %c0_14] : memref<1x128xf32, #tpu.memory_space<vmem>>, vector<1x128xf32>
    tpu.vector_store %arg6[%c0_13, %c0_14], %30 {strides = array<i32>} : memref<1x128xf32, #tpu.memory_space<vmem>>, vector<1x128xf32>,
    %c256_i32 = arith.constant 256 : i32
    %32 = arith.muli %arg1, %c256_i32 : i32
    %33 = tpu.assume_multiple %32, 8 : i32
    %c0_15 = arith.constant 0 : index
    %34 = arith.index_cast %33 : i32 to index
    %c0_16 = arith.constant 0 : index
    %35 = vector.load %arg4[%c0_15, %34, %c0_16] : memref<1x256x128xf32, #tpu.memory_space<vmem>>, vector<1x256x128xf32>
    %36 = vector.shape_cast %35 : vector<1x256x128xf32> to vector<256x128xf32>
    %37 = vector.shape_cast %17 : vector<256x128xf32> to vector<1x256x128xf32>
    tpu.vector_store %arg4[%c0_15, %34, %c0_16], %37 {strides = array<i32>} : memref<1x256x128xf32, #tpu.memory_space<vmem>>, vector<1x256x128xf32>,
    %c0_i32_17 = arith.constant 0 : i32
    %38 = arith.cmpi eq, %arg1, %c0_i32_17 : i32
    %39 = arith.extui %38 : i1 to i32
    %c0_i32_18 = arith.constant 0 : i32
    %40 = arith.cmpi ne, %39, %c0_i32_18 : i32
    scf.if %40 {
      %c0_19 = arith.constant 0 : index
      %c0_20 = arith.constant 0 : index
      %41 = vector.load %arg5[%c0_19, %c0_20] : memref<1x128xf32, #tpu.memory_space<vmem>>, vector<1x128xf32>
      %cst_21 = arith.constant 3.906250e-03 : f32
      %42 = vector.broadcast %cst_21 : f32 to vector<1x128xf32>
      %43 = arith.mulf %41, %42 : vector<1x128xf32>
      %c0_22 = arith.constant 0 : index
      %c0_23 = arith.constant 0 : index
      %44 = vector.load %arg6[%c0_22, %c0_23] : memref<1x128xf32, #tpu.memory_space<vmem>>, vector<1x128xf32>
      %cst_24 = arith.constant 3.906250e-03 : f32
      %45 = vector.broadcast %cst_24 : f32 to vector<1x128xf32>
      %46 = arith.mulf %44, %45 : vector<1x128xf32>
      %47 = arith.mulf %43, %43 : vector<1x128xf32>
      %48 = arith.subf %46, %47 : vector<1x128xf32>
      %cst_25 = arith.constant 9.99999974E-6 : f32
      %49 = vector.broadcast %cst_25 : f32 to vector<1x128xf32>
      %50 = arith.addf %48, %49 : vector<1x128xf32>
      %51 = math.rsqrt %50 : vector<1x128xf32>
      %c0_26 = arith.constant 0 : index
      %c0_27 = arith.constant 0 : index
      %c0_28 = arith.constant 0 : index
      %52 = vector.load %arg4[%c0_26, %c0_27, %c0_28] : memref<1x256x128xf32, #tpu.memory_space<vmem>>, vector<1x256x128xf32>
      %53 = vector.shape_cast %52 : vector<1x256x128xf32> to vector<256x128xf32>
      %54 = vector.broadcast %43 : vector<1x128xf32> to vector<256x128xf32>
      %55 = arith.subf %53, %54 : vector<256x128xf32>
      %56 = vector.broadcast %51 : vector<1x128xf32> to vector<256x128xf32>
      %57 = arith.mulf %55, %56 : vector<256x128xf32>
      %cst_29 = arith.constant 0.000000e+00 : f32
      %58 = vector.broadcast %cst_29 : f32 to vector<256x128xf32>
      %59 = arith.maximumf %57, %58 : vector<256x128xf32>
      %c0_30 = arith.constant 0 : index
      %c0_31 = arith.constant 0 : index
      %c0_32 = arith.constant 0 : index
      %60 = vector.load %arg4[%c0_30, %c0_31, %c0_32] : memref<1x256x128xf32, #tpu.memory_space<vmem>>, vector<1x256x128xf32>
      %61 = vector.shape_cast %60 : vector<1x256x128xf32> to vector<256x128xf32>
      %62 = vector.shape_cast %59 : vector<256x128xf32> to vector<1x256x128xf32>
      tpu.vector_store %arg4[%c0_30, %c0_31, %c0_32], %62 {strides = array<i32>} : memref<1x256x128xf32, #tpu.memory_space<vmem>>, vector<1x256x128xf32>,
    } else {
    }
    return
  }
  func.func @transform_0(%arg0: i32, %arg1: i32) -> (i32, i32, i32, i32) {
    %c0_i32 = arith.constant 0 : i32
    %c0_i32_0 = arith.constant 0 : i32
    %c0_i32_1 = arith.constant 0 : i32
    %c0_i32_2 = arith.constant 0 : i32
    return %arg0, %c0_i32, %c0_i32_0, %c0_i32_1 : i32, i32, i32, i32
  }
  func.func @transform_1(%arg0: i32, %arg1: i32) -> (i32, i32) {
    %c0_i32 = arith.constant 0 : i32
    %c0_i32_0 = arith.constant 0 : i32
    %c0_i32_1 = arith.constant 0 : i32
    return %c0_i32, %c0_i32_0 : i32, i32
  }
  func.func @transform_2(%arg0: i32, %arg1: i32) -> (i32, i32, i32) {
    %c0_i32 = arith.constant 0 : i32
    %c0_i32_0 = arith.constant 0 : i32
    %c0_i32_1 = arith.constant 0 : i32
    return %arg0, %c0_i32, %c0_i32_0 : i32, i32, i32
  }
}

</mosaic_0001>

<llo_original>
// kernel: tpu_custom_call.1
$region0: #{tpu_custom_call.1}
  #allocation0 [shape = 'u32[]', space=smem, size = 0x4, offset = 0x4, fixed_abs, tag = 'smem constant byte address 0x4 - core index']
  #allocation1 [shape = 'u32[144,128]{1,0:T(1,128)}', space=vmem, size = 0x12000, scoped, tag = 'internal scratch']
  #allocation2 [shape = 'f32[1,128]{1,0:T(1,128)}', space=vmem, size = 0x200, scoped, tag = 'scratch operand']
  #allocation3 [shape = 'f32[1,128]{1,0:T(1,128)}', space=vmem, size = 0x200, scoped, tag = 'scratch operand']
  %s0 = inlined_call_operand.vmem [shape: bf16[2,18,18,4], index: 0, kind: input, shape index: {}]
  %s1 = inlined_call_operand.vmem [shape: bf16[36,128], index: 1, kind: input, shape index: {}]
  %s2 = inlined_call_operand.hbm [shape: f32[2,256,128], index: 2, kind: output, shape index: {}]
  %s3 = sld [smem:[#allocation0]]
  $region49: #{tpu_custom_call.1} parent=0
    _
  %s5 = ssub.s32 1, %s3
  %s6 = scalar_select 0, %s5, %s3
  $region1: #{tpu_custom_call.1} parent=0
    #allocation4 [shape = 'u8[262144]{0}', space=vmem, size = 0x40000, scoped, tag = 'output window, operand 0']
    #allocation5 [shape = 's32[2]{0}', space=sflag, size = 0x8, scoped, tag = 'scoped memory for tpu_custom_call.1']
    %7 = vsyncpa [#allocation5], 0
    %s8 = scalar_lea.sflag [#allocation5], 1
    %9 = vsyncpa %s8, 0
    loop: start=0, step=1, limit=4
    $region2: #{tpu_custom_call.1} parent=1 // loop_pre_header
      _
    $region3: #{tpu_custom_call.1} parent=1 // loop_header
      %s11 = sphi 0, %s15
      %p12 = scmp.ge.s32.totalorder %s11, 4
      %s18 = sphi 0, %s30
      %s19 = sphi 0, %s26
      %s20 = sphi 0, %s18
      %s21 = sphi 0, %s19
      %s22 = sphi 0, %s20
      %s23 = sphi 0, %s21
      %s33 = sphi 0, %s35
      %s36 = sphi 0, %s33
      %s37 = sphi 0, %s36
      %s53 = sphi 0, %s37
      %s57 = sphi 0, %s57
      %s59 = sphi 0, %s57
      %s60 = sphi 0, %s59
      %s74 = sphi 0, %s60
      %s80 = sphi 0, %s82
      %s83 = sphi 0, %s80
      %s84 = sphi 0, %s83
      %s100 = sphi 0, %s84
    $region4: #{tpu_custom_call.1} parent=1 // loop_header_branch
      %14 = sbr.rel (%p12) target = $region8
    $region5: #{tpu_custom_call.1} parent=1 // loop_body
      %s16 = ssub.s32 %s11, 1
      %s17 = ssub.s32 %s11, 2
      %s24 = sadd.s32 1, %s19
      %p25 = scmp.ge.s32.totalorder %s24, 1
      %s26 = scalar_select %p25, 0, %s24
      %s27 = sadd.s32 1, %s18
      %s28 = scalar_select %p25, %s27, %s18
      %p29 = scmp.ge.s32.totalorder %s28, 2
      %s30 = scalar_select %p29, 0, %s28
      %s31 = ssub.s32 %s18, %s30
      %p32 = scmp.eq.s32.totalorder %s31, 0
      %s34 = sadd.s32 %s33, 1
      %s35 = scalar_select %p32, %s33, %s34
      %p38 = pneg %p32
      %p39 = scmp.eq.s32.totalorder %s11, 1
      %p40 = por %p38, %p39
      %p41 = scmp.ne.s32.totalorder %s33, %s36
      %p42 = scmp.eq.s32.totalorder %s11, 0
      %p43 = por %p41, %p42
      %p44 = scmp.ne.s32.totalorder %s33, %s36
      %p45 = scmp.eq.s32.totalorder %s16, 1
      %p46 = por %p44, %p45
      %p47 = scmp.ne.s32.totalorder %s36, %s37
      %p48 = scmp.eq.s32.totalorder %s16, 0
      %p49 = por %p47, %p48
      %p50 = scmp.ne.s32.totalorder %s36, %s37
      %p51 = scmp.eq.s32.totalorder %s17, 1
      %p52 = por %p50, %p51
      %p54 = scmp.ne.s32.totalorder %s37, %s53
      %p55 = scmp.eq.s32.totalorder %s17, 0
      %p56 = por %p54, %p55
      %s58 = sadd.s32 %s57, 1
      %p61 = scmp.eq.s32.totalorder %s11, 1
      %p62 = scmp.ne.s32.totalorder %s57, %s59
      %p63 = scmp.eq.s32.totalorder %s11, 0
      %p64 = por %p62, %p63
      %p65 = scmp.ne.s32.totalorder %s57, %s59
      %p66 = scmp.eq.s32.totalorder %s16, 1
      %p67 = por %p65, %p66
      %p68 = scmp.ne.s32.totalorder %s59, %s60
      %p69 = scmp.eq.s32.totalorder %s16, 0
      %p70 = por %p68, %p69
      %p71 = scmp.ne.s32.totalorder %s59, %s60
      %p72 = scmp.eq.s32.totalorder %s17, 1
      %p73 = por %p71, %p72
      %p75 = scmp.ne.s32.totalorder %s60, %s74
      %p76 = scmp.eq.s32.totalorder %s17, 0
      %p77 = por %p75, %p76
      %s78 = ssub.s32 %s18, %s30
      %p79 = scmp.eq.s32.totalorder %s78, 0
      %s81 = sadd.s32 %s80, 1
      %s82 = scalar_select %p79, %s80, %s81
      %p85 = pneg %p79
      %p86 = scmp.eq.s32.totalorder %s11, 1
      %p87 = por %p85, %p86
      %p88 = scmp.ne.s32.totalorder %s80, %s83
      %p89 = scmp.eq.s32.totalorder %s11, 0
      %p90 = por %p88, %p89
      %p91 = scmp.ne.s32.totalorder %s80, %s83
      %p92 = scmp.eq.s32.totalorder %s16, 1
      %p93 = por %p91, %p92
      %p94 = scmp.ne.s32.totalorder %s83, %s84
      %p95 = scmp.eq.s32.totalorder %s16, 0
      %p96 = por %p94, %p95
      %p97 = scmp.ne.s32.totalorder %s83, %s84
      %p98 = scmp.eq.s32.totalorder %s17, 1
      %p99 = por %p97, %p98
      %p101 = scmp.ne.s32.totalorder %s84, %s100
      %p102 = scmp.eq.s32.totalorder %s17, 0
      %p103 = por %p101, %p102
      %p104 = scmp.le.s32.totalorder 1, %s11
      %p105 = scmp.lt.s32.totalorder %s11, 3
      %p106 = pnand %p104, %p105
      %p107 = pneg %p106
      // Predicated region
      $region9: #{tpu_custom_call.1} parent=5 // pred_check
        _
      $region10: #{tpu_custom_call.1} parent=5 // pred_check_branch
        %109 = sbr.rel (%p106) target = $region12
      $region11: #{tpu_custom_call.1} parent=5 // pred_region
        %s110 = ssub.s32 %s11, 1
        // Predicated region
        $region13: #{tpu_custom_call.1} parent=11 // pred_check
          %p111 = pneg %p70
        $region14: #{tpu_custom_call.1} parent=11 // pred_check_branch
          %113 = sbr.rel (%p111) target = $region16
        $region15: #{tpu_custom_call.1} parent=11 // pred_region
          _
        $region16: #{tpu_custom_call.1} parent=11 // pred_fallthru
          _
      $region12: #{tpu_custom_call.1} parent=5 // pred_fallthru
        _
      %p114 = scmp.lt.s32.totalorder %s11, 2
      // Predicated region
      $region17: #{tpu_custom_call.1} parent=5 // pred_check
        %p115 = pneg %p114
      $region18: #{tpu_custom_call.1} parent=5 // pred_check_branch
        %117 = sbr.rel (%p115) target = $region20
      $region19: #{tpu_custom_call.1} parent=5 // pred_region
        // Predicated region
        $region21: #{tpu_custom_call.1} parent=19 // pred_check
          %p118 = pneg %p43
        $region22: #{tpu_custom_call.1} parent=19 // pred_check_branch
          %120 = sbr.rel (%p118) target = $region24
        $region23: #{tpu_custom_call.1} parent=19 // pred_region
          %p121 = scmp.lt.s32.totalorder %s18, 1
          %s122 = scalar_select %p121, %s18, 1
          %s123 = smul.addr %s122, 54
          %s124 = smul.addr %s123, 4
          %s125 = scalar_lea.vmem %s0, %s124
        $region24: #{tpu_custom_call.1} parent=19 // pred_fallthru
          _
      $region20: #{tpu_custom_call.1} parent=5 // pred_fallthru
        _
      %p126 = scmp.le.s32.totalorder 1, %s11
      %p127 = scmp.lt.s32.totalorder %s11, 3
      %p128 = pnand %p126, %p127
      %p129 = pneg %p128
      // Predicated region
      $region25: #{tpu_custom_call.1} parent=5 // pred_check
        _
      $region26: #{tpu_custom_call.1} parent=5 // pred_check_branch
        %131 = sbr.rel (%p128) target = $region28
      $region27: #{tpu_custom_call.1} parent=5 // pred_region
        %s132 = ssub.s32 %s11, 1
        %p133 = scmp.lt.s32.totalorder %s20, 1
        %s134 = scalar_select %p133, %s20, 1
        %s135 = smul.addr %s134, 54
        %s136 = smul.addr %s135, 4
        %s137 = scalar_lea.vmem %s0, %s136
        %p138 = pneg %p49
        %p139 = pneg %p46
        %p140 = pneg %p70
        %p141 = pneg %p67
        %p142 = pneg %p96
        %p143 = pneg %p93
        %s144 = sand.u32 %s83, 1
        %s145 = scalar_lea.sflag [#allocation5], %s144
        %s146 = sand.u32 %s83, 1
        %s147 = smul.addr %s146, 256
        %s148 = scalar_lea.vmem [#allocation4], %s147
        %p149 = scmp.lt.s32.totalorder %s20, 1
        %s150 = scalar_select %p149, %s20, 1
        %s151 = smul.addr %s150, 54
        %s152 = smul.addr %s151, 4
        %s153 = scalar_lea.vmem %s0, %s152
        %s155 = smul.u32 %s21, 16
        %s156 = smul.u32 %s155, 3
        %s157 = smul.addr %s156, 4
        %s158 = scalar_lea.vmem %s153, %s157
        %v159 = vld [vmem:[%s158] sm:$0xf]
        %v160 = vld [vmem:[%s158 + $0x4] sm:$0xf]
        %v161 = vld [vmem:[%s158 + $0x8] sm:$0x1]
        %v162 = vld [vmem:[%s158 + $0xc] sm:$0xf]
        %v163 = vld [vmem:[%s158 + $0x10] sm:$0xf]
        %v164 = vld [vmem:[%s158 + $0x14] sm:$0x1]
        %v165 = vld [vmem:[%s158 + $0x18] sm:$0xf]
        %v166 = vld [vmem:[%s158 + $0x1c] sm:$0xf]
        %v167 = vld [vmem:[%s158 + $0x20] sm:$0x1]
        %v168 = vld [vmem:[%s158 + $0x24] sm:$0xf]
        %v169 = vld [vmem:[%s158 + $0x28] sm:$0xf]
        %v170 = vld [vmem:[%s158 + $0x2c] sm:$0x1]
        %v171 = vld [vmem:[%s158 + $0x30] sm:$0xf]
        %v172 = vld [vmem:[%s158 + $0x34] sm:$0xf]
        %v173 = vld [vmem:[%s158 + $0x38] sm:$0x1]
        %v174 = vld [vmem:[%s158 + $0x3c] sm:$0xf]
        %v175 = vld [vmem:[%s158 + $0x40] sm:$0xf]
        %v176 = vld [vmem:[%s158 + $0x44] sm:$0x1]
        %v177 = vld [vmem:[%s158 + $0x48] sm:$0xf]
        %v178 = vld [vmem:[%s158 + $0x4c] sm:$0xf]
        %v179 = vld [vmem:[%s158 + $0x50] sm:$0x1]
        %v180 = vld [vmem:[%s158 + $0x54] sm:$0xf]
        %v181 = vld [vmem:[%s158 + $0x58] sm:$0xf]
        %v182 = vld [vmem:[%s158 + $0x5c] sm:$0x1]
        %v183 = vld [vmem:[%s158 + $0x60] sm:$0xf]
        %v184 = vld [vmem:[%s158 + $0x64] sm:$0xf]
        %v185 = vld [vmem:[%s158 + $0x68] sm:$0x1]
        %v186 = vld [vmem:[%s158 + $0x6c] sm:$0xf]
        %v187 = vld [vmem:[%s158 + $0x70] sm:$0xf]
        %v188 = vld [vmem:[%s158 + $0x74] sm:$0x1]
        %v189 = vld [vmem:[%s158 + $0x78] sm:$0xf]
        %v190 = vld [vmem:[%s158 + $0x7c] sm:$0xf]
        %v191 = vld [vmem:[%s158 + $0x80] sm:$0x1]
        %v192 = vld [vmem:[%s158 + $0x84] sm:$0xf]
        %v193 = vld [vmem:[%s158 + $0x88] sm:$0xf]
        %v194 = vld [vmem:[%s158 + $0x8c] sm:$0x1]
        %v195 = vld [vmem:[%s158 + $0x90] sm:$0xf]
        %v196 = vld [vmem:[%s158 + $0x94] sm:$0xf]
        %v197 = vld [vmem:[%s158 + $0x98] sm:$0x1]
        %v198 = vld [vmem:[%s158 + $0x9c] sm:$0xf]
        %v199 = vld [vmem:[%s158 + $0xa0] sm:$0xf]
        %v200 = vld [vmem:[%s158 + $0xa4] sm:$0x1]
        %v201 = vld [vmem:[%s158 + $0xa8] sm:$0xf]
        %v202 = vld [vmem:[%s158 + $0xac] sm:$0xf]
        %v203 = vld [vmem:[%s158 + $0xb0] sm:$0x1]
        %v204 = vld [vmem:[%s158 + $0xb4] sm:$0xf]
        %v205 = vld [vmem:[%s158 + $0xb8] sm:$0xf]
        %v206 = vld [vmem:[%s158 + $0xbc] sm:$0x1]
        %v207 = vld [vmem:[%s158 + $0xc0] sm:$0xf]
        %v208 = vld [vmem:[%s158 + $0xc4] sm:$0xf]
        %v209 = vld [vmem:[%s158 + $0xc8] sm:$0x1]
        %v210 = vld [vmem:[%s158 + $0xcc] sm:$0xf]
        %v211 = vld [vmem:[%s158 + $0xd0] sm:$0xf]
        %v212 = vld [vmem:[%s158 + $0xd4] sm:$0x1]
        %v245 = vunpack.c.l.b16 %v159
        %v246 = vunpack.c.l.b16 %v160
        %v247 = vunpack.c.l.b16 %v162
        %v248 = vunpack.c.l.b16 %v163
        %v249 = vunpack.c.l.b16 %v165
        %v250 = vunpack.c.l.b16 %v166
        %v251 = vunpack.c.l.b16 %v168
        %v252 = vunpack.c.l.b16 %v169
        %v253 = vunpack.c.l.b16 %v171
        %v254 = vunpack.c.l.b16 %v172
        %v255 = vunpack.c.l.b16 %v174
        %v256 = vunpack.c.l.b16 %v175
        %v257 = vunpack.c.l.b16 %v177
        %v258 = vunpack.c.l.b16 %v178
        %v259 = vunpack.c.l.b16 %v180
        %v260 = vunpack.c.l.b16 %v181
        %v261 = vunpack.c.l.b16 %v183
        %v262 = vunpack.c.l.b16 %v184
        %v263 = vunpack.c.l.b16 %v186
        %v264 = vunpack.c.l.b16 %v187
        %v265 = vunpack.c.l.b16 %v189
        %v266 = vunpack.c.l.b16 %v190
        %v267 = vunpack.c.l.b16 %v192
        %v268 = vunpack.c.l.b16 %v193
        %v269 = vunpack.c.l.b16 %v195
        %v270 = vunpack.c.l.b16 %v196
        %v271 = vunpack.c.l.b16 %v198
        %v272 = vunpack.c.l.b16 %v199
        %v273 = vunpack.c.l.b16 %v201
        %v274 = vunpack.c.l.b16 %v202
        %v275 = vunpack.c.l.b16 %v204
        %v276 = vunpack.c.l.b16 %v205
        %v277 = vpack.c.b16 %v246, %v245
        %v278 = vpack.c.b16 %v248, %v247
        %v279 = vpack.c.b16 %v250, %v249
        %v280 = vpack.c.b16 %v252, %v251
        %v281 = vpack.c.b16 %v254, %v253
        %v282 = vpack.c.b16 %v256, %v255
        %v283 = vpack.c.b16 %v258, %v257
        %v284 = vpack.c.b16 %v260, %v259
        %v285 = vpack.c.b16 %v262, %v261
        %v286 = vpack.c.b16 %v264, %v263
        %v287 = vpack.c.b16 %v266, %v265
        %v288 = vpack.c.b16 %v268, %v267
        %v289 = vpack.c.b16 %v270, %v269
        %v290 = vpack.c.b16 %v272, %v271
        %v291 = vpack.c.b16 %v274, %v273
        %v292 = vpack.c.b16 %v276, %v275
        %v309 = vunpack.c.l.b16 %v161
        %v310 = vunpack.c.l.b16 %v164
        %v311 = vunpack.c.l.b16 %v167
        %v312 = vunpack.c.l.b16 %v170
        %v313 = vunpack.c.l.b16 %v173
        %v314 = vunpack.c.l.b16 %v176
        %v315 = vunpack.c.l.b16 %v179
        %v316 = vunpack.c.l.b16 %v182
        %v317 = vunpack.c.l.b16 %v185
        %v318 = vunpack.c.l.b16 %v188
        %v319 = vunpack.c.l.b16 %v191
        %v320 = vunpack.c.l.b16 %v194
        %v321 = vunpack.c.l.b16 %v197
        %v322 = vunpack.c.l.b16 %v200
        %v323 = vunpack.c.l.b16 %v203
        %v324 = vunpack.c.l.b16 %v206
        %v325 = vpack.c.b16 %v309, %v309
        %v326 = vpack.c.b16 %v310, %v310
        %v327 = vpack.c.b16 %v311, %v311
        %v328 = vpack.c.b16 %v312, %v312
        %v329 = vpack.c.b16 %v313, %v313
        %v330 = vpack.c.b16 %v314, %v314
        %v331 = vpack.c.b16 %v315, %v315
        %v332 = vpack.c.b16 %v316, %v316
        %v333 = vpack.c.b16 %v317, %v317
        %v334 = vpack.c.b16 %v318, %v318
        %v335 = vpack.c.b16 %v319, %v319
        %v336 = vpack.c.b16 %v320, %v320
        %v337 = vpack.c.b16 %v321, %v321
        %v338 = vpack.c.b16 %v322, %v322
        %v339 = vpack.c.b16 %v323, %v323
        %v340 = vpack.c.b16 %v324, %v324
        %vm341 = vsmask.f32 7424
        %v343 = vshrl.u32 %v277, 16
        %v345 = vshll.u32 %v277, 16
        %v347 = vrot.slane %v345, 1
        %v348 = vor.u32 %v343, %v347
        %v350 = vshll.u32 %v325, 16
        %v352 = vrot.slane %v350, 1
        %v353 = vsel %vm341, %v348, %v352
        %v355 = vshrl.u32 %v278, 16
        %v357 = vshll.u32 %v278, 16
        %v359 = vrot.slane %v357, 1
        %v360 = vor.u32 %v355, %v359
        %v362 = vshll.u32 %v326, 16
        %v364 = vrot.slane %v362, 1
        %v365 = vsel %vm341, %v360, %v364
        %v367 = vshrl.u32 %v279, 16
        %v369 = vshll.u32 %v279, 16
        %v371 = vrot.slane %v369, 1
        %v372 = vor.u32 %v367, %v371
        %v374 = vshll.u32 %v327, 16
        %v376 = vrot.slane %v374, 1
        %v377 = vsel %vm341, %v372, %v376
        %v379 = vshrl.u32 %v280, 16
        %v381 = vshll.u32 %v280, 16
        %v383 = vrot.slane %v381, 1
        %v384 = vor.u32 %v379, %v383
        %v386 = vshll.u32 %v328, 16
        %v388 = vrot.slane %v386, 1
        %v389 = vsel %vm341, %v384, %v388
        %v391 = vshrl.u32 %v281, 16
        %v393 = vshll.u32 %v281, 16
        %v395 = vrot.slane %v393, 1
        %v396 = vor.u32 %v391, %v395
        %v398 = vshll.u32 %v329, 16
        %v400 = vrot.slane %v398, 1
        %v401 = vsel %vm341, %v396, %v400
        %v403 = vshrl.u32 %v282, 16
        %v405 = vshll.u32 %v282, 16
        %v407 = vrot.slane %v405, 1
        %v408 = vor.u32 %v403, %v407
        %v410 = vshll.u32 %v330, 16
        %v412 = vrot.slane %v410, 1
        %v413 = vsel %vm341, %v408, %v412
        %v415 = vshrl.u32 %v283, 16
        %v417 = vshll.u32 %v283, 16
        %v419 = vrot.slane %v417, 1
        %v420 = vor.u32 %v415, %v419
        %v422 = vshll.u32 %v331, 16
        %v424 = vrot.slane %v422, 1
        %v425 = vsel %vm341, %v420, %v424
        %v427 = vshrl.u32 %v284, 16
        %v429 = vshll.u32 %v284, 16
        %v431 = vrot.slane %v429, 1
        %v432 = vor.u32 %v427, %v431
        %v434 = vshll.u32 %v332, 16
        %v436 = vrot.slane %v434, 1
        %v437 = vsel %vm341, %v432, %v436
        %v439 = vshrl.u32 %v285, 16
        %v441 = vshll.u32 %v285, 16
        %v443 = vrot.slane %v441, 1
        %v444 = vor.u32 %v439, %v443
        %v446 = vshll.u32 %v333, 16
        %v448 = vrot.slane %v446, 1
        %v449 = vsel %vm341, %v444, %v448
        %v451 = vshrl.u32 %v286, 16
        %v453 = vshll.u32 %v286, 16
        %v455 = vrot.slane %v453, 1
        %v456 = vor.u32 %v451, %v455
        %v458 = vshll.u32 %v334, 16
        %v460 = vrot.slane %v458, 1
        %v461 = vsel %vm341, %v456, %v460
        %v463 = vshrl.u32 %v287, 16
        %v465 = vshll.u32 %v287, 16
        %v467 = vrot.slane %v465, 1
        %v468 = vor.u32 %v463, %v467
        %v470 = vshll.u32 %v335, 16
        %v472 = vrot.slane %v470, 1
        %v473 = vsel %vm341, %v468, %v472
        %v475 = vshrl.u32 %v288, 16
        %v477 = vshll.u32 %v288, 16
        %v479 = vrot.slane %v477, 1
        %v480 = vor.u32 %v475, %v479
        %v482 = vshll.u32 %v336, 16
        %v484 = vrot.slane %v482, 1
        %v485 = vsel %vm341, %v480, %v484
        %v487 = vshrl.u32 %v289, 16
        %v489 = vshll.u32 %v289, 16
        %v491 = vrot.slane %v489, 1
        %v492 = vor.u32 %v487, %v491
        %v494 = vshll.u32 %v337, 16
        %v496 = vrot.slane %v494, 1
        %v497 = vsel %vm341, %v492, %v496
        %v499 = vshrl.u32 %v290, 16
        %v501 = vshll.u32 %v290, 16
        %v503 = vrot.slane %v501, 1
        %v504 = vor.u32 %v499, %v503
        %v506 = vshll.u32 %v338, 16
        %v508 = vrot.slane %v506, 1
        %v509 = vsel %vm341, %v504, %v508
        %v511 = vshrl.u32 %v291, 16
        %v513 = vshll.u32 %v291, 16
        %v515 = vrot.slane %v513, 1
        %v516 = vor.u32 %v511, %v515
        %v518 = vshll.u32 %v339, 16
        %v520 = vrot.slane %v518, 1
        %v521 = vsel %vm341, %v516, %v520
        %v523 = vshrl.u32 %v292, 16
        %v525 = vshll.u32 %v292, 16
        %v527 = vrot.slane %v525, 1
        %v528 = vor.u32 %v523, %v527
        %v530 = vshll.u32 %v340, 16
        %v532 = vrot.slane %v530, 1
        %v533 = vsel %vm341, %v528, %v532
        %534 = vrot.lane.b32.xlu0 %v353, 4
        %v535 = vpop.permute.xlu0 %534
        %536 = vrot.lane.b32.xlu0 %v365, 4
        %v537 = vpop.permute.xlu0 %536
        %538 = vrot.lane.b32.xlu0 %v377, 4
        %v539 = vpop.permute.xlu0 %538
        %540 = vrot.lane.b32.xlu0 %v389, 4
        %v541 = vpop.permute.xlu0 %540
        %542 = vrot.lane.b32.xlu0 %v401, 4
        %v543 = vpop.permute.xlu0 %542
        %544 = vrot.lane.b32.xlu0 %v413, 4
        %v545 = vpop.permute.xlu0 %544
        %546 = vrot.lane.b32.xlu0 %v425, 4
        %v547 = vpop.permute.xlu0 %546
        %548 = vrot.lane.b32.xlu0 %v437, 4
        %v549 = vpop.permute.xlu0 %548
        %550 = vrot.lane.b32.xlu0 %v449, 4
        %v551 = vpop.permute.xlu0 %550
        %552 = vrot.lane.b32.xlu0 %v461, 4
        %v553 = vpop.permute.xlu0 %552
        %554 = vrot.lane.b32.xlu0 %v473, 4
        %v555 = vpop.permute.xlu0 %554
        %556 = vrot.lane.b32.xlu0 %v485, 4
        %v557 = vpop.permute.xlu0 %556
        %558 = vrot.lane.b32.xlu0 %v497, 4
        %v559 = vpop.permute.xlu0 %558
        %560 = vrot.lane.b32.xlu0 %v509, 4
        %v561 = vpop.permute.xlu0 %560
        %562 = vrot.lane.b32.xlu0 %v521, 4
        %v563 = vpop.permute.xlu0 %562
        %564 = vrot.lane.b32.xlu0 %v533, 4
        %v565 = vpop.permute.xlu0 %564
        %vm566 = vcmask 1046528
        %v567 = vrot.slane %v277, 1
        %v568 = vrot.slane %v325, 1
        %v569 = vsel %vm566, %v567, %v568
        %v570 = vrot.slane %v278, 1
        %v571 = vrot.slane %v326, 1
        %v572 = vsel %vm566, %v570, %v571
        %v573 = vrot.slane %v279, 1
        %v574 = vrot.slane %v327, 1
        %v575 = vsel %vm566, %v573, %v574
        %v576 = vrot.slane %v280, 1
        %v577 = vrot.slane %v328, 1
        %v578 = vsel %vm566, %v576, %v577
        %v579 = vrot.slane %v281, 1
        %v580 = vrot.slane %v329, 1
        %v581 = vsel %vm566, %v579, %v580
        %v582 = vrot.slane %v282, 1
        %v583 = vrot.slane %v330, 1
        %v584 = vsel %vm566, %v582, %v583
        %v585 = vrot.slane %v283, 1
        %v586 = vrot.slane %v331, 1
        %v587 = vsel %vm566, %v585, %v586
        %v588 = vrot.slane %v284, 1
        %v589 = vrot.slane %v332, 1
        %v590 = vsel %vm566, %v588, %v589
        %v591 = vrot.slane %v285, 1
        %v592 = vrot.slane %v333, 1
        %v593 = vsel %vm566, %v591, %v592
        %v594 = vrot.slane %v286, 1
        %v595 = vrot.slane %v334, 1
        %v596 = vsel %vm566, %v594, %v595
        %v597 = vrot.slane %v287, 1
        %v598 = vrot.slane %v335, 1
        %v599 = vsel %vm566, %v597, %v598
        %v600 = vrot.slane %v288, 1
        %v601 = vrot.slane %v336, 1
        %v602 = vsel %vm566, %v600, %v601
        %v603 = vrot.slane %v289, 1
        %v604 = vrot.slane %v337, 1
        %v605 = vsel %vm566, %v603, %v604
        %v606 = vrot.slane %v290, 1
        %v607 = vrot.slane %v338, 1
        %v608 = vsel %vm566, %v606, %v607
        %v609 = vrot.slane %v291, 1
        %v610 = vrot.slane %v339, 1
        %v611 = vsel %vm566, %v609, %v610
        %v612 = vrot.slane %v292, 1
        %v613 = vrot.slane %v340, 1
        %v614 = vsel %vm566, %v612, %v613
        %615 = vrot.lane.b32.xlu0 %v569, 8
        %v616 = vpop.permute.xlu0 %615
        %617 = vrot.lane.b32.xlu0 %v572, 8
        %v618 = vpop.permute.xlu0 %617
        %619 = vrot.lane.b32.xlu0 %v575, 8
        %v620 = vpop.permute.xlu0 %619
        %621 = vrot.lane.b32.xlu0 %v578, 8
        %v622 = vpop.permute.xlu0 %621
        %623 = vrot.lane.b32.xlu0 %v581, 8
        %v624 = vpop.permute.xlu0 %623
        %625 = vrot.lane.b32.xlu0 %v584, 8
        %v626 = vpop.permute.xlu0 %625
        %627 = vrot.lane.b32.xlu0 %v587, 8
        %v628 = vpop.permute.xlu0 %627
        %629 = vrot.lane.b32.xlu0 %v590, 8
        %v630 = vpop.permute.xlu0 %629
        %631 = vrot.lane.b32.xlu0 %v593, 8
        %v632 = vpop.permute.xlu0 %631
        %633 = vrot.lane.b32.xlu0 %v596, 8
        %v634 = vpop.permute.xlu0 %633
        %635 = vrot.lane.b32.xlu0 %v599, 8
        %v636 = vpop.permute.xlu0 %635
        %637 = vrot.lane.b32.xlu0 %v602, 8
        %v638 = vpop.permute.xlu0 %637
        %639 = vrot.lane.b32.xlu0 %v605, 8
        %v640 = vpop.permute.xlu0 %639
        %641 = vrot.lane.b32.xlu0 %v608, 8
        %v642 = vpop.permute.xlu0 %641
        %643 = vrot.lane.b32.xlu0 %v611, 8
        %v644 = vpop.permute.xlu0 %643
        %645 = vrot.lane.b32.xlu0 %v614, 8
        %v646 = vpop.permute.xlu0 %645
        %v649 = vunpack.c.l.b16 %v207
        %v650 = vunpack.c.l.b16 %v208
        %v651 = vpack.c.b16 %v650, %v649
        %652 = vrot.lane.b32.xlu0 %v278, 12
        %v653 = vpop.permute.xlu0 %652
        %654 = vrot.lane.b32.xlu0 %v279, 12
        %v655 = vpop.permute.xlu0 %654
        %656 = vrot.lane.b32.xlu0 %v280, 12
        %v657 = vpop.permute.xlu0 %656
        %658 = vrot.lane.b32.xlu0 %v281, 12
        %v659 = vpop.permute.xlu0 %658
        %660 = vrot.lane.b32.xlu0 %v282, 12
        %v661 = vpop.permute.xlu0 %660
        %662 = vrot.lane.b32.xlu0 %v283, 12
        %v663 = vpop.permute.xlu0 %662
        %664 = vrot.lane.b32.xlu0 %v284, 12
        %v665 = vpop.permute.xlu0 %664
        %666 = vrot.lane.b32.xlu0 %v285, 12
        %v667 = vpop.permute.xlu0 %666
        %668 = vrot.lane.b32.xlu0 %v286, 12
        %v669 = vpop.permute.xlu0 %668
        %670 = vrot.lane.b32.xlu0 %v287, 12
        %v671 = vpop.permute.xlu0 %670
        %672 = vrot.lane.b32.xlu0 %v288, 12
        %v673 = vpop.permute.xlu0 %672
        %674 = vrot.lane.b32.xlu0 %v289, 12
        %v675 = vpop.permute.xlu0 %674
        %676 = vrot.lane.b32.xlu0 %v290, 12
        %v677 = vpop.permute.xlu0 %676
        %678 = vrot.lane.b32.xlu0 %v291, 12
        %v679 = vpop.permute.xlu0 %678
        %680 = vrot.lane.b32.xlu0 %v292, 12
        %v681 = vpop.permute.xlu0 %680
        %682 = vrot.lane.b32.xlu0 %v651, 12
        %v683 = vpop.permute.xlu0 %682
        %v685 = vunpack.c.l.b16 %v209
        %v686 = vpack.c.b16 %v685, %v685
        %v688 = vshrl.u32 %v651, 16
        %v690 = vshll.u32 %v651, 16
        %v692 = vrot.slane %v690, 1
        %v693 = vor.u32 %v688, %v692
        %v695 = vshll.u32 %v686, 16
        %v697 = vrot.slane %v695, 1
        %v698 = vsel %vm341, %v693, %v697
        %699 = vrot.lane.b32.xlu0 %v365, 16
        %v700 = vpop.permute.xlu0 %699
        %701 = vrot.lane.b32.xlu0 %v377, 16
        %v702 = vpop.permute.xlu0 %701
        %703 = vrot.lane.b32.xlu0 %v389, 16
        %v704 = vpop.permute.xlu0 %703
        %705 = vrot.lane.b32.xlu0 %v401, 16
        %v706 = vpop.permute.xlu0 %705
        %707 = vrot.lane.b32.xlu0 %v413, 16
        %v708 = vpop.permute.xlu0 %707
        %709 = vrot.lane.b32.xlu0 %v425, 16
        %v710 = vpop.permute.xlu0 %709
        %711 = vrot.lane.b32.xlu0 %v437, 16
        %v712 = vpop.permute.xlu0 %711
        %713 = vrot.lane.b32.xlu0 %v449, 16
        %v714 = vpop.permute.xlu0 %713
        %715 = vrot.lane.b32.xlu0 %v461, 16
        %v716 = vpop.permute.xlu0 %715
        %717 = vrot.lane.b32.xlu0 %v473, 16
        %v718 = vpop.permute.xlu0 %717
        %719 = vrot.lane.b32.xlu0 %v485, 16
        %v720 = vpop.permute.xlu0 %719
        %721 = vrot.lane.b32.xlu0 %v497, 16
        %v722 = vpop.permute.xlu0 %721
        %723 = vrot.lane.b32.xlu0 %v509, 16
        %v724 = vpop.permute.xlu0 %723
        %725 = vrot.lane.b32.xlu0 %v521, 16
        %v726 = vpop.permute.xlu0 %725
        %727 = vrot.lane.b32.xlu0 %v533, 16
        %v728 = vpop.permute.xlu0 %727
        %729 = vrot.lane.b32.xlu0 %v698, 16
        %v730 = vpop.permute.xlu0 %729
        %v731 = vrot.slane %v651, 1
        %v732 = vrot.slane %v686, 1
        %v733 = vsel %vm566, %v731, %v732
        %734 = vrot.lane.b32.xlu0 %v572, 20
        %v735 = vpop.permute.xlu0 %734
        %736 = vrot.lane.b32.xlu0 %v575, 20
        %v737 = vpop.permute.xlu0 %736
        %738 = vrot.lane.b32.xlu0 %v578, 20
        %v739 = vpop.permute.xlu0 %738
        %740 = vrot.lane.b32.xlu0 %v581, 20
        %v741 = vpop.permute.xlu0 %740
        %742 = vrot.lane.b32.xlu0 %v584, 20
        %v743 = vpop.permute.xlu0 %742
        %744 = vrot.lane.b32.xlu0 %v587, 20
        %v745 = vpop.permute.xlu0 %744
        %746 = vrot.lane.b32.xlu0 %v590, 20
        %v747 = vpop.permute.xlu0 %746
        %748 = vrot.lane.b32.xlu0 %v593, 20
        %v749 = vpop.permute.xlu0 %748
        %750 = vrot.lane.b32.xlu0 %v596, 20
        %v751 = vpop.permute.xlu0 %750
        %752 = vrot.lane.b32.xlu0 %v599, 20
        %v753 = vpop.permute.xlu0 %752
        %754 = vrot.lane.b32.xlu0 %v602, 20
        %v755 = vpop.permute.xlu0 %754
        %756 = vrot.lane.b32.xlu0 %v605, 20
        %v757 = vpop.permute.xlu0 %756
        %758 = vrot.lane.b32.xlu0 %v608, 20
        %v759 = vpop.permute.xlu0 %758
        %760 = vrot.lane.b32.xlu0 %v611, 20
        %v761 = vpop.permute.xlu0 %760
        %762 = vrot.lane.b32.xlu0 %v614, 20
        %v763 = vpop.permute.xlu0 %762
        %764 = vrot.lane.b32.xlu0 %v733, 20
        %v765 = vpop.permute.xlu0 %764
        %v768 = vunpack.c.l.b16 %v210
        %v769 = vunpack.c.l.b16 %v211
        %v770 = vpack.c.b16 %v769, %v768
        %771 = vrot.lane.b32.xlu0 %v279, 24
        %v772 = vpop.permute.xlu0 %771
        %773 = vrot.lane.b32.xlu0 %v280, 24
        %v774 = vpop.permute.xlu0 %773
        %775 = vrot.lane.b32.xlu0 %v281, 24
        %v776 = vpop.permute.xlu0 %775
        %777 = vrot.lane.b32.xlu0 %v282, 24
        %v778 = vpop.permute.xlu0 %777
        %779 = vrot.lane.b32.xlu0 %v283, 24
        %v780 = vpop.permute.xlu0 %779
        %781 = vrot.lane.b32.xlu0 %v284, 24
        %v782 = vpop.permute.xlu0 %781
        %783 = vrot.lane.b32.xlu0 %v285, 24
        %v784 = vpop.permute.xlu0 %783
        %785 = vrot.lane.b32.xlu0 %v286, 24
        %v786 = vpop.permute.xlu0 %785
        %787 = vrot.lane.b32.xlu0 %v287, 24
        %v788 = vpop.permute.xlu0 %787
        %789 = vrot.lane.b32.xlu0 %v288, 24
        %v790 = vpop.permute.xlu0 %789
        %791 = vrot.lane.b32.xlu0 %v289, 24
        %v792 = vpop.permute.xlu0 %791
        %793 = vrot.lane.b32.xlu0 %v290, 24
        %v794 = vpop.permute.xlu0 %793
        %795 = vrot.lane.b32.xlu0 %v291, 24
        %v796 = vpop.permute.xlu0 %795
        %797 = vrot.lane.b32.xlu0 %v292, 24
        %v798 = vpop.permute.xlu0 %797
        %799 = vrot.lane.b32.xlu0 %v651, 24
        %v800 = vpop.permute.xlu0 %799
        %801 = vrot.lane.b32.xlu0 %v770, 24
        %v802 = vpop.permute.xlu0 %801
        %v804 = vunpack.c.l.b16 %v212
        %v805 = vpack.c.b16 %v804, %v804
        %v807 = vshrl.u32 %v770, 16
        %v809 = vshll.u32 %v770, 16
        %v811 = vrot.slane %v809, 1
        %v812 = vor.u32 %v807, %v811
        %v814 = vshll.u32 %v805, 16
        %v816 = vrot.slane %v814, 1
        %v817 = vsel %vm341, %v812, %v816
        %818 = vrot.lane.b32.xlu0 %v377, 28
        %v819 = vpop.permute.xlu0 %818
        %820 = vrot.lane.b32.xlu0 %v389, 28
        %v821 = vpop.permute.xlu0 %820
        %822 = vrot.lane.b32.xlu0 %v401, 28
        %v823 = vpop.permute.xlu0 %822
        %824 = vrot.lane.b32.xlu0 %v413, 28
        %v825 = vpop.permute.xlu0 %824
        %826 = vrot.lane.b32.xlu0 %v425, 28
        %v827 = vpop.permute.xlu0 %826
        %828 = vrot.lane.b32.xlu0 %v437, 28
        %v829 = vpop.permute.xlu0 %828
        %830 = vrot.lane.b32.xlu0 %v449, 28
        %v831 = vpop.permute.xlu0 %830
        %832 = vrot.lane.b32.xlu0 %v461, 28
        %v833 = vpop.permute.xlu0 %832
        %834 = vrot.lane.b32.xlu0 %v473, 28
        %v835 = vpop.permute.xlu0 %834
        %836 = vrot.lane.b32.xlu0 %v485, 28
        %v837 = vpop.permute.xlu0 %836
        %838 = vrot.lane.b32.xlu0 %v497, 28
        %v839 = vpop.permute.xlu0 %838
        %840 = vrot.lane.b32.xlu0 %v509, 28
        %v841 = vpop.permute.xlu0 %840
        %842 = vrot.lane.b32.xlu0 %v521, 28
        %v843 = vpop.permute.xlu0 %842
        %844 = vrot.lane.b32.xlu0 %v533, 28
        %v845 = vpop.permute.xlu0 %844
        %846 = vrot.lane.b32.xlu0 %v698, 28
        %v847 = vpop.permute.xlu0 %846
        %848 = vrot.lane.b32.xlu0 %v817, 28
        %v849 = vpop.permute.xlu0 %848
        %v850 = vrot.slane %v770, 1
        %v851 = vrot.slane %v805, 1
        %v852 = vsel %vm566, %v850, %v851
        %853 = vrot.lane.b32.xlu0 %v575, 32
        %v854 = vpop.permute.xlu0 %853
        %855 = vrot.lane.b32.xlu0 %v578, 32
        %v856 = vpop.permute.xlu0 %855
        %857 = vrot.lane.b32.xlu0 %v581, 32
        %v858 = vpop.permute.xlu0 %857
        %859 = vrot.lane.b32.xlu0 %v584, 32
        %v860 = vpop.permute.xlu0 %859
        %861 = vrot.lane.b32.xlu0 %v587, 32
        %v862 = vpop.permute.xlu0 %861
        %863 = vrot.lane.b32.xlu0 %v590, 32
        %v864 = vpop.permute.xlu0 %863
        %865 = vrot.lane.b32.xlu0 %v593, 32
        %v866 = vpop.permute.xlu0 %865
        %867 = vrot.lane.b32.xlu0 %v596, 32
        %v868 = vpop.permute.xlu0 %867
        %869 = vrot.lane.b32.xlu0 %v599, 32
        %v870 = vpop.permute.xlu0 %869
        %871 = vrot.lane.b32.xlu0 %v602, 32
        %v872 = vpop.permute.xlu0 %871
        %873 = vrot.lane.b32.xlu0 %v605, 32
        %v874 = vpop.permute.xlu0 %873
        %875 = vrot.lane.b32.xlu0 %v608, 32
        %v876 = vpop.permute.xlu0 %875
        %877 = vrot.lane.b32.xlu0 %v611, 32
        %v878 = vpop.permute.xlu0 %877
        %879 = vrot.lane.b32.xlu0 %v614, 32
        %v880 = vpop.permute.xlu0 %879
        %881 = vrot.lane.b32.xlu0 %v733, 32
        %v882 = vpop.permute.xlu0 %881
        %883 = vrot.lane.b32.xlu0 %v852, 32
        %v884 = vpop.permute.xlu0 %883
        %vm885 = vcmask 31744
        %v887 = vsel %vm885, %v277, %v535
        %v889 = vsel %vm885, %v278, %v537
        %v891 = vsel %vm885, %v279, %v539
        %v893 = vsel %vm885, %v280, %v541
        %v895 = vsel %vm885, %v281, %v543
        %v897 = vsel %vm885, %v282, %v545
        %v899 = vsel %vm885, %v283, %v547
        %v901 = vsel %vm885, %v284, %v549
        %v903 = vsel %vm885, %v285, %v551
        %v905 = vsel %vm885, %v286, %v553
        %v907 = vsel %vm885, %v287, %v555
        %v909 = vsel %vm885, %v288, %v557
        %v911 = vsel %vm885, %v289, %v559
        %v913 = vsel %vm885, %v290, %v561
        %v915 = vsel %vm885, %v291, %v563
        %v917 = vsel %vm885, %v292, %v565
        %vm918 = vcmask 64512
        %v920 = vsel %vm918, %v887, %v616
        %v922 = vsel %vm918, %v889, %v618
        %v924 = vsel %vm918, %v891, %v620
        %v926 = vsel %vm918, %v893, %v622
        %v928 = vsel %vm918, %v895, %v624
        %v930 = vsel %vm918, %v897, %v626
        %v932 = vsel %vm918, %v899, %v628
        %v934 = vsel %vm918, %v901, %v630
        %v936 = vsel %vm918, %v903, %v632
        %v938 = vsel %vm918, %v905, %v634
        %v940 = vsel %vm918, %v907, %v636
        %v942 = vsel %vm918, %v909, %v638
        %v944 = vsel %vm918, %v911, %v640
        %v946 = vsel %vm918, %v913, %v642
        %v948 = vsel %vm918, %v915, %v644
        %v950 = vsel %vm918, %v917, %v646
        %vm951 = vcmask 97280
        %v953 = vsel %vm951, %v920, %v653
        %v955 = vsel %vm951, %v922, %v655
        %v957 = vsel %vm951, %v924, %v657
        %v959 = vsel %vm951, %v926, %v659
        %v961 = vsel %vm951, %v928, %v661
        %v963 = vsel %vm951, %v930, %v663
        %v965 = vsel %vm951, %v932, %v665
        %v967 = vsel %vm951, %v934, %v667
        %v969 = vsel %vm951, %v936, %v669
        %v971 = vsel %vm951, %v938, %v671
        %v973 = vsel %vm951, %v940, %v673
        %v975 = vsel %vm951, %v942, %v675
        %v977 = vsel %vm951, %v944, %v677
        %v979 = vsel %vm951, %v946, %v679
        %v981 = vsel %vm951, %v948, %v681
        %v983 = vsel %vm951, %v950, %v683
        %vm984 = vcmask 130048
        %v986 = vsel %vm984, %v953, %v700
        %v988 = vsel %vm984, %v955, %v702
        %v990 = vsel %vm984, %v957, %v704
        %v992 = vsel %vm984, %v959, %v706
        %v994 = vsel %vm984, %v961, %v708
        %v996 = vsel %vm984, %v963, %v710
        %v998 = vsel %vm984, %v965, %v712
        %v1000 = vsel %vm984, %v967, %v714
        %v1002 = vsel %vm984, %v969, %v716
        %v1004 = vsel %vm984, %v971, %v718
        %v1006 = vsel %vm984, %v973, %v720
        %v1008 = vsel %vm984, %v975, %v722
        %v1010 = vsel %vm984, %v977, %v724
        %v1012 = vsel %vm984, %v979, %v726
        %v1014 = vsel %vm984, %v981, %v728
        %v1016 = vsel %vm984, %v983, %v730
        %vm1017 = vcmask 162816
        %v1019 = vsel %vm1017, %v986, %v735
        %v1021 = vsel %vm1017, %v988, %v737
        %v1023 = vsel %vm1017, %v990, %v739
        %v1025 = vsel %vm1017, %v992, %v741
        %v1027 = vsel %vm1017, %v994, %v743
        %v1029 = vsel %vm1017, %v996, %v745
        %v1031 = vsel %vm1017, %v998, %v747
        %v1033 = vsel %vm1017, %v1000, %v749
        %v1035 = vsel %vm1017, %v1002, %v751
        %v1037 = vsel %vm1017, %v1004, %v753
        %v1039 = vsel %vm1017, %v1006, %v755
        %v1041 = vsel %vm1017, %v1008, %v757
        %v1043 = vsel %vm1017, %v1010, %v759
        %v1045 = vsel %vm1017, %v1012, %v761
        %v1047 = vsel %vm1017, %v1014, %v763
        %v1049 = vsel %vm1017, %v1016, %v765
        %vm1050 = vcmask 195584
        %v1052 = vsel %vm1050, %v1019, %v772
        %v1054 = vsel %vm1050, %v1021, %v774
        %v1056 = vsel %vm1050, %v1023, %v776
        %v1058 = vsel %vm1050, %v1025, %v778
        %v1060 = vsel %vm1050, %v1027, %v780
        %v1062 = vsel %vm1050, %v1029, %v782
        %v1064 = vsel %vm1050, %v1031, %v784
        %v1066 = vsel %vm1050, %v1033, %v786
        %v1068 = vsel %vm1050, %v1035, %v788
        %v1070 = vsel %vm1050, %v1037, %v790
        %v1072 = vsel %vm1050, %v1039, %v792
        %v1074 = vsel %vm1050, %v1041, %v794
        %v1076 = vsel %vm1050, %v1043, %v796
        %v1078 = vsel %vm1050, %v1045, %v798
        %v1080 = vsel %vm1050, %v1047, %v800
        %v1082 = vsel %vm1050, %v1049, %v802
        %vm1083 = vcmask 228352
        %v1085 = vsel %vm1083, %v1052, %v819
        %v1087 = vsel %vm1083, %v1054, %v821
        %v1089 = vsel %vm1083, %v1056, %v823
        %v1091 = vsel %vm1083, %v1058, %v825
        %v1093 = vsel %vm1083, %v1060, %v827
        %v1095 = vsel %vm1083, %v1062, %v829
        %v1097 = vsel %vm1083, %v1064, %v831
        %v1099 = vsel %vm1083, %v1066, %v833
        %v1101 = vsel %vm1083, %v1068, %v835
        %v1103 = vsel %vm1083, %v1070, %v837
        %v1105 = vsel %vm1083, %v1072, %v839
        %v1107 = vsel %vm1083, %v1074, %v841
        %v1109 = vsel %vm1083, %v1076, %v843
        %v1111 = vsel %vm1083, %v1078, %v845
        %v1113 = vsel %vm1083, %v1080, %v847
        %v1115 = vsel %vm1083, %v1082, %v849
        %vm1116 = vcmask 261120
        %v1118 = vsel %vm1116, %v1085, %v854
        %v1120 = vsel %vm1116, %v1087, %v856
        %v1122 = vsel %vm1116, %v1089, %v858
        %v1124 = vsel %vm1116, %v1091, %v860
        %v1126 = vsel %vm1116, %v1093, %v862
        %v1128 = vsel %vm1116, %v1095, %v864
        %v1130 = vsel %vm1116, %v1097, %v866
        %v1132 = vsel %vm1116, %v1099, %v868
        %v1134 = vsel %vm1116, %v1101, %v870
        %v1136 = vsel %vm1116, %v1103, %v872
        %v1138 = vsel %vm1116, %v1105, %v874
        %v1140 = vsel %vm1116, %v1107, %v876
        %v1142 = vsel %vm1116, %v1109, %v878
        %v1144 = vsel %vm1116, %v1111, %v880
        %v1146 = vsel %vm1116, %v1113, %v882
        %v1148 = vsel %vm1116, %v1115, %v884
        %v1149 = vld [vmem:[%s1] sm:$0xf]
        %v1150 = vld [vmem:[%s1 + $0x4] sm:$0xf]
        %v1151 = vld [vmem:[%s1 + $0x8] sm:$0xf]
        %v1152 = vld [vmem:[%s1 + $0xc] sm:$0xf]
        %v1153 = vld [vmem:[%s1 + $0x10] sm:$0x3]
        %v1159 = vunpack.c.l.b16 %v1149
        %v1160 = vunpack.c.l.b16 %v1150
        %v1161 = vunpack.c.l.b16 %v1151
        %v1162 = vunpack.c.l.b16 %v1152
        %v1163 = vunpack.c.l.b16 %v1153
        %v1164 = vpack.c.b16 %v1160, %v1159
        %v1165 = vpack.c.b16 %v1162, %v1161
        %v1166 = vpack.c.b16 %v1163, %v1163
        %vm1169 = vcmask 293888
        %v1170 = vsel %vm1169, %v1118, 0
        %v1172 = vsel %vm1169, %v1120, 0
        %v1174 = vsel %vm1169, %v1122, 0
        %v1176 = vsel %vm1169, %v1124, 0
        %v1178 = vsel %vm1169, %v1126, 0
        %v1180 = vsel %vm1169, %v1128, 0
        %v1182 = vsel %vm1169, %v1130, 0
        %v1184 = vsel %vm1169, %v1132, 0
        %v1186 = vsel %vm1169, %v1134, 0
        %v1188 = vsel %vm1169, %v1136, 0
        %v1190 = vsel %vm1169, %v1138, 0
        %v1192 = vsel %vm1169, %v1140, 0
        %v1194 = vsel %vm1169, %v1142, 0
        %v1196 = vsel %vm1169, %v1144, 0
        %v1198 = vsel %vm1169, %v1146, 0
        %v1200 = vsel %vm1169, %v1148, 0
        %vm1202 = vcmask 1041408
        %v1204 = vsel %vm1202, %v1166, 0
        %1206 = vmatprep.subr.bf16.mxu0 0
        %1207 = vmatpush1.bf16.msra.mxu0 %v1164
        %1208 = vmatprep.subr.bf16.mxu0 0
        %1209 = vmatpush1.bf16.msra.mxu0 %v1165
        %1210 = vmatprep.subr.bf16.mxu0 0
        %1211 = vmatpush1.bf16.msra.mxu0 %v1204
        %1212 = vmatprep.subr.bf16.mxu0 0
        %1213 = vmatpush1.bf16.msra.mxu0 0
        %1214 = vmatprep.subr.bf16.mxu0 0
        %1215 = vmatpush1.bf16.msra.mxu0 0
        %1216 = vmatprep.subr.bf16.mxu0 0
        %1217 = vmatpush1.bf16.msra.mxu0 0
        %1218 = vmatprep.subr.bf16.mxu0 0
        %1219 = vmatpush1.bf16.msra.mxu0 0
        %1220 = vmatprep.subr.bf16.mxu0 0
        %1221 = vmatpush1.bf16.msra.mxu0 0
        %1222 = vmatprep.subr.bf16.mxu0 0
        %1223 = vmatpush1.bf16.msra.mxu0 0
        %1224 = vmatprep.subr.bf16.mxu0 0
        %1225 = vmatpush1.bf16.msra.mxu0 0
        %1226 = vmatprep.subr.bf16.mxu0 0
        %1227 = vmatpush1.bf16.msra.mxu0 0
        %1228 = vmatprep.subr.bf16.mxu0 0
        %1229 = vmatpush1.bf16.msra.mxu0 0
        %1230 = vmatprep.subr.bf16.mxu0 0
        %1231 = vmatpush1.bf16.msra.mxu0 0
        %1232 = vmatprep.subr.bf16.mxu0 0
        %1233 = vmatpush1.bf16.msra.mxu0 0
        %1234 = vmatprep.subr.bf16.mxu0 0
        %1235 = vmatpush1.bf16.msra.mxu0 0
        %1236 = vmatprep.subr.bf16.mxu0 0
        %1237 = vmatpush1.bf16.msra.mxu0 0
        %1238 = vmatprep.mubr.bf16.mxu0 0
        %1239 = vmatmul.mubr.bf16.gmra.mrb[0].mxu0 %v1170
        %v1240 = vpop.f32.mrb[0].mxu0
        %v1241 = vadd.f32 0.0, %v1240
        %v1242 = vpop.f32.mrb[0].mxu0
        %v1243 = vpop.f32.mrb[0].mxu0
        %v1244 = vadd.f32 0.0, %v1243
        %v1245 = vpop.f32.mrb[0].mxu0
        %1246 = vmatprep.mubr.bf16.mxu0 0
        %1247 = vmatmul.mubr.bf16.gmra.mrb[0].mxu0 %v1172
        %v1248 = vpop.f32.mrb[0].mxu0
        %v1249 = vadd.f32 0.0, %v1248
        %v1250 = vpop.f32.mrb[0].mxu0
        %v1251 = vpop.f32.mrb[0].mxu0
        %v1252 = vadd.f32 0.0, %v1251
        %v1253 = vpop.f32.mrb[0].mxu0
        %1254 = vmatprep.mubr.bf16.mxu0 0
        %1255 = vmatmul.mubr.bf16.gmra.mrb[0].mxu0 %v1174
        %v1256 = vpop.f32.mrb[0].mxu0
        %v1257 = vadd.f32 0.0, %v1256
        %v1258 = vpop.f32.mrb[0].mxu0
        %v1259 = vpop.f32.mrb[0].mxu0
        %v1260 = vadd.f32 0.0, %v1259
        %v1261 = vpop.f32.mrb[0].mxu0
        %1262 = vmatprep.mubr.bf16.mxu0 0
        %1263 = vmatmul.mubr.bf16.gmra.mrb[0].mxu0 %v1176
        %v1264 = vpop.f32.mrb[0].mxu0
        %v1265 = vadd.f32 0.0, %v1264
        %v1266 = vpop.f32.mrb[0].mxu0
        %v1267 = vpop.f32.mrb[0].mxu0
        %v1268 = vadd.f32 0.0, %v1267
        %v1269 = vpop.f32.mrb[0].mxu0
        %1270 = vmatprep.mubr.bf16.mxu0 0
        %1271 = vmatmul.mubr.bf16.gmra.mrb[0].mxu0 %v1178
        %v1272 = vpop.f32.mrb[0].mxu0
        %v1273 = vadd.f32 0.0, %v1272
        %v1274 = vpop.f32.mrb[0].mxu0
        %v1275 = vpop.f32.mrb[0].mxu0
        %v1276 = vadd.f32 0.0, %v1275
        %v1277 = vpop.f32.mrb[0].mxu0
        %1278 = vmatprep.mubr.bf16.mxu0 0
        %1279 = vmatmul.mubr.bf16.gmra.mrb[0].mxu0 %v1180
        %v1280 = vpop.f32.mrb[0].mxu0
        %v1281 = vadd.f32 0.0, %v1280
        %v1282 = vpop.f32.mrb[0].mxu0
        %v1283 = vpop.f32.mrb[0].mxu0
        %v1284 = vadd.f32 0.0, %v1283
        %v1285 = vpop.f32.mrb[0].mxu0
        %1286 = vmatprep.mubr.bf16.mxu0 0
        %1287 = vmatmul.mubr.bf16.gmra.mrb[0].mxu0 %v1182
        %v1288 = vpop.f32.mrb[0].mxu0
        %v1289 = vadd.f32 0.0, %v1288
        %v1290 = vpop.f32.mrb[0].mxu0
        %v1291 = vpop.f32.mrb[0].mxu0
        %v1292 = vadd.f32 0.0, %v1291
        %v1293 = vpop.f32.mrb[0].mxu0
        %1294 = vmatprep.mubr.bf16.mxu0 0
        %1295 = vmatmul.mubr.bf16.gmra.mrb[0].mxu0 %v1184
        %v1296 = vpop.f32.mrb[0].mxu0
        %v1297 = vadd.f32 0.0, %v1296
        %v1298 = vpop.f32.mrb[0].mxu0
        %v1299 = vpop.f32.mrb[0].mxu0
        %v1300 = vadd.f32 0.0, %v1299
        %v1301 = vpop.f32.mrb[0].mxu0
        %1302 = vmatprep.mubr.bf16.mxu0 0
        %1303 = vmatmul.mubr.bf16.gmra.mrb[0].mxu0 %v1186
        %v1304 = vpop.f32.mrb[0].mxu0
        %v1305 = vadd.f32 0.0, %v1304
        %v1306 = vpop.f32.mrb[0].mxu0
        %v1307 = vpop.f32.mrb[0].mxu0
        %v1308 = vadd.f32 0.0, %v1307
        %v1309 = vpop.f32.mrb[0].mxu0
        %1310 = vmatprep.mubr.bf16.mxu0 0
        %1311 = vmatmul.mubr.bf16.gmra.mrb[0].mxu0 %v1188
        %v1312 = vpop.f32.mrb[0].mxu0
        %v1313 = vadd.f32 0.0, %v1312
        %v1314 = vpop.f32.mrb[0].mxu0
        %v1315 = vpop.f32.mrb[0].mxu0
        %v1316 = vadd.f32 0.0, %v1315
        %v1317 = vpop.f32.mrb[0].mxu0
        %1318 = vmatprep.mubr.bf16.mxu0 0
        %1319 = vmatmul.mubr.bf16.gmra.mrb[0].mxu0 %v1190
        %v1320 = vpop.f32.mrb[0].mxu0
        %v1321 = vadd.f32 0.0, %v1320
        %v1322 = vpop.f32.mrb[0].mxu0
        %v1323 = vpop.f32.mrb[0].mxu0
        %v1324 = vadd.f32 0.0, %v1323
        %v1325 = vpop.f32.mrb[0].mxu0
        %1326 = vmatprep.mubr.bf16.mxu0 0
        %1327 = vmatmul.mubr.bf16.gmra.mrb[0].mxu0 %v1192
        %v1328 = vpop.f32.mrb[0].mxu0
        %v1329 = vadd.f32 0.0, %v1328
        %v1330 = vpop.f32.mrb[0].mxu0
        %v1331 = vpop.f32.mrb[0].mxu0
        %v1332 = vadd.f32 0.0, %v1331
        %v1333 = vpop.f32.mrb[0].mxu0
        %1334 = vmatprep.mubr.bf16.mxu0 0
        %1335 = vmatmul.mubr.bf16.gmra.mrb[0].mxu0 %v1194
        %v1336 = vpop.f32.mrb[0].mxu0
        %v1337 = vadd.f32 0.0, %v1336
        %v1338 = vpop.f32.mrb[0].mxu0
        %v1339 = vpop.f32.mrb[0].mxu0
        %v1340 = vadd.f32 0.0, %v1339
        %v1341 = vpop.f32.mrb[0].mxu0
        %1342 = vmatprep.mubr.bf16.mxu0 0
        %1343 = vmatmul.mubr.bf16.gmra.mrb[0].mxu0 %v1196
        %v1344 = vpop.f32.mrb[0].mxu0
        %v1345 = vadd.f32 0.0, %v1344
        %v1346 = vpop.f32.mrb[0].mxu0
        %v1347 = vpop.f32.mrb[0].mxu0
        %v1348 = vadd.f32 0.0, %v1347
        %v1349 = vpop.f32.mrb[0].mxu0
        %1350 = vmatprep.mubr.bf16.mxu0 0
        %1351 = vmatmul.mubr.bf16.gmra.mrb[0].mxu0 %v1198
        %v1352 = vpop.f32.mrb[0].mxu0
        %v1353 = vadd.f32 0.0, %v1352
        %v1354 = vpop.f32.mrb[0].mxu0
        %v1355 = vpop.f32.mrb[0].mxu0
        %v1356 = vadd.f32 0.0, %v1355
        %v1357 = vpop.f32.mrb[0].mxu0
        %1358 = vmatprep.mubr.bf16.mxu0 0
        %1359 = vmatmul.mubr.bf16.gmra.mrb[0].mxu0 %v1200
        %v1360 = vpop.f32.mrb[0].mxu0
        %v1361 = vadd.f32 0.0, %v1360
        %v1362 = vpop.f32.mrb[0].mxu0
        %v1363 = vpop.f32.mrb[0].mxu0
        %v1364 = vadd.f32 0.0, %v1363
        %v1365 = vpop.f32.mrb[0].mxu0
        %1366 = vdwg.mxu0
        %p1367 = scmp.eq.s32.totalorder %s21, 0
        // Predicated region
        $region29: #{tpu_custom_call.1} parent=27 // pred_check
          %p1368 = pneg %p1367
        $region30: #{tpu_custom_call.1} parent=27 // pred_check_branch
          %1370 = sbr.rel (%p1368) target = $region32
        $region31: #{tpu_custom_call.1} parent=27 // pred_region
          %1371 = vst [vmem:[#allocation2] sm:$0x1] 0.0
          %1372 = vst [vmem:[#allocation3] sm:$0x1] 0.0
        $region32: #{tpu_custom_call.1} parent=27 // pred_fallthru
          _
        %v1373 = vld [vmem:[#allocation2] sm:$0x1]
        %v1374 = vadd.f32 %v1241, %v1244
        %v1375 = vadd.f32 %v1374, %v1249
        %v1376 = vadd.f32 %v1375, %v1252
        %v1377 = vadd.f32 %v1376, %v1257
        %v1378 = vadd.f32 %v1377, %v1260
        %v1379 = vadd.f32 %v1378, %v1265
        %v1380 = vadd.f32 %v1379, %v1268
        %v1381 = vadd.f32 %v1380, %v1273
        %v1382 = vadd.f32 %v1381, %v1276
        %v1383 = vadd.f32 %v1382, %v1281
        %v1384 = vadd.f32 %v1383, %v1284
        %v1385 = vadd.f32 %v1384, %v1289
        %v1386 = vadd.f32 %v1385, %v1292
        %v1387 = vadd.f32 %v1386, %v1297
        %v1388 = vadd.f32 %v1387, %v1300
        %v1389 = vadd.f32 %v1388, %v1305
        %v1390 = vadd.f32 %v1389, %v1308
        %v1391 = vadd.f32 %v1390, %v1313
        %v1392 = vadd.f32 %v1391, %v1316
        %v1393 = vadd.f32 %v1392, %v1321
        %v1394 = vadd.f32 %v1393, %v1324
        %v1395 = vadd.f32 %v1394, %v1329
        %v1396 = vadd.f32 %v1395, %v1332
        %v1397 = vadd.f32 %v1396, %v1337
        %v1398 = vadd.f32 %v1397, %v1340
        %v1399 = vadd.f32 %v1398, %v1345
        %v1400 = vadd.f32 %v1399, %v1348
        %v1401 = vadd.f32 %v1400, %v1353
        %v1402 = vadd.f32 %v1401, %v1356
        %v1403 = vadd.f32 %v1402, %v1361
        %v1404 = vadd.f32 %v1403, %v1364
        %v1405 = vrot.slane %v1404, 4
        %v1406 = vadd.f32 %v1404, %v1405
        %v1407 = vrot.slane %v1406, 2
        %v1408 = vadd.f32 %v1406, %v1407
        %v1409 = vrot.slane %v1408, 1
        %v1410 = vadd.f32 %v1408, %v1409
        %v1411 = vadd.f32 %v1373, %v1410
        %1412 = vst [vmem:[#allocation2] sm:$0x1] %v1411
        %v1413 = vld [vmem:[#allocation3] sm:$0x1]
        %v1414 = vmul.f32 %v1241, %v1241
        %v1415 = vmul.f32 %v1244, %v1244
        %v1416 = vmul.f32 %v1249, %v1249
        %v1417 = vmul.f32 %v1252, %v1252
        %v1418 = vmul.f32 %v1257, %v1257
        %v1419 = vmul.f32 %v1260, %v1260
        %v1420 = vmul.f32 %v1265, %v1265
        %v1421 = vmul.f32 %v1268, %v1268
        %v1422 = vmul.f32 %v1273, %v1273
        %v1423 = vmul.f32 %v1276, %v1276
        %v1424 = vmul.f32 %v1281, %v1281
        %v1425 = vmul.f32 %v1284, %v1284
        %v1426 = vmul.f32 %v1289, %v1289
        %v1427 = vmul.f32 %v1292, %v1292
        %v1428 = vmul.f32 %v1297, %v1297
        %v1429 = vmul.f32 %v1300, %v1300
        %v1430 = vmul.f32 %v1305, %v1305
        %v1431 = vmul.f32 %v1308, %v1308
        %v1432 = vmul.f32 %v1313, %v1313
        %v1433 = vmul.f32 %v1316, %v1316
        %v1434 = vmul.f32 %v1321, %v1321
        %v1435 = vmul.f32 %v1324, %v1324
        %v1436 = vmul.f32 %v1329, %v1329
        %v1437 = vmul.f32 %v1332, %v1332
        %v1438 = vmul.f32 %v1337, %v1337
        %v1439 = vmul.f32 %v1340, %v1340
        %v1440 = vmul.f32 %v1345, %v1345
        %v1441 = vmul.f32 %v1348, %v1348
        %v1442 = vmul.f32 %v1353, %v1353
        %v1443 = vmul.f32 %v1356, %v1356
        %v1444 = vmul.f32 %v1361, %v1361
        %v1445 = vmul.f32 %v1364, %v1364
        %v1446 = vadd.f32 %v1414, %v1415
        %v1447 = vadd.f32 %v1446, %v1416
        %v1448 = vadd.f32 %v1447, %v1417
        %v1449 = vadd.f32 %v1448, %v1418
        %v1450 = vadd.f32 %v1449, %v1419
        %v1451 = vadd.f32 %v1450, %v1420
        %v1452 = vadd.f32 %v1451, %v1421
        %v1453 = vadd.f32 %v1452, %v1422
        %v1454 = vadd.f32 %v1453, %v1423
        %v1455 = vadd.f32 %v1454, %v1424
        %v1456 = vadd.f32 %v1455, %v1425
        %v1457 = vadd.f32 %v1456, %v1426
        %v1458 = vadd.f32 %v1457, %v1427
        %v1459 = vadd.f32 %v1458, %v1428
        %v1460 = vadd.f32 %v1459, %v1429
        %v1461 = vadd.f32 %v1460, %v1430
        %v1462 = vadd.f32 %v1461, %v1431
        %v1463 = vadd.f32 %v1462, %v1432
        %v1464 = vadd.f32 %v1463, %v1433
        %v1465 = vadd.f32 %v1464, %v1434
        %v1466 = vadd.f32 %v1465, %v1435
        %v1467 = vadd.f32 %v1466, %v1436
        %v1468 = vadd.f32 %v1467, %v1437
        %v1469 = vadd.f32 %v1468, %v1438
        %v1470 = vadd.f32 %v1469, %v1439
        %v1471 = vadd.f32 %v1470, %v1440
        %v1472 = vadd.f32 %v1471, %v1441
        %v1473 = vadd.f32 %v1472, %v1442
        %v1474 = vadd.f32 %v1473, %v1443
        %v1475 = vadd.f32 %v1474, %v1444
        %v1476 = vadd.f32 %v1475, %v1445
        %v1477 = vrot.slane %v1476, 4
        %v1478 = vadd.f32 %v1476, %v1477
        %v1479 = vrot.slane %v1478, 2
        %v1480 = vadd.f32 %v1478, %v1479
        %v1481 = vrot.slane %v1480, 1
        %v1482 = vadd.f32 %v1480, %v1481
        %v1483 = vadd.f32 %v1413, %v1482
        %1484 = vst [vmem:[#allocation3] sm:$0x1] %v1483
        %s1485 = smul.u32 %s21, 256
        %s1486 = scalar_lea.vmem %s148, %s1485 [#allocation4]
        %1487 = vst [vmem:[%s1486] sm:$0xff] %v1241
        %1488 = vst [vmem:[%s1486 + $0x8] sm:$0xff] %v1244
        %1489 = vst [vmem:[%s1486 + $0x10] sm:$0xff] %v1249
        %1490 = vst [vmem:[%s1486 + $0x18] sm:$0xff] %v1252
        %1491 = vst [vmem:[%s1486 + $0x20] sm:$0xff] %v1257
        %1492 = vst [vmem:[%s1486 + $0x28] sm:$0xff] %v1260
        %1493 = vst [vmem:[%s1486 + $0x30] sm:$0xff] %v1265
        %1494 = vst [vmem:[%s1486 + $0x38] sm:$0xff] %v1268
        %1495 = vst [vmem:[%s1486 + $0x40] sm:$0xff] %v1273
        %1496 = vst [vmem:[%s1486 + $0x48] sm:$0xff] %v1276
        %1497 = vst [vmem:[%s1486 + $0x50] sm:$0xff] %v1281
        %1498 = vst [vmem:[%s1486 + $0x58] sm:$0xff] %v1284
        %1499 = vst [vmem:[%s1486 + $0x60] sm:$0xff] %v1289
        %1500 = vst [vmem:[%s1486 + $0x68] sm:$0xff] %v1292
        %1501 = vst [vmem:[%s1486 + $0x70] sm:$0xff] %v1297
        %1502 = vst [vmem:[%s1486 + $0x78] sm:$0xff] %v1300
        %1503 = vst [vmem:[%s1486 + $0x80] sm:$0xff] %v1305
        %1504 = vst [vmem:[%s1486 + $0x88] sm:$0xff] %v1308
        %1505 = vst [vmem:[%s1486 + $0x90] sm:$0xff] %v1313
        %1506 = vst [vmem:[%s1486 + $0x98] sm:$0xff] %v1316
        %1507 = vst [vmem:[%s1486 + $0xa0] sm:$0xff] %v1321
        %1508 = vst [vmem:[%s1486 + $0xa8] sm:$0xff] %v1324
        %1509 = vst [vmem:[%s1486 + $0xb0] sm:$0xff] %v1329
        %1510 = vst [vmem:[%s1486 + $0xb8] sm:$0xff] %v1332
        %1511 = vst [vmem:[%s1486 + $0xc0] sm:$0xff] %v1337
        %1512 = vst [vmem:[%s1486 + $0xc8] sm:$0xff] %v1340
        %1513 = vst [vmem:[%s1486 + $0xd0] sm:$0xff] %v1345
        %1514 = vst [vmem:[%s1486 + $0xd8] sm:$0xff] %v1348
        %1515 = vst [vmem:[%s1486 + $0xe0] sm:$0xff] %v1353
        %1516 = vst [vmem:[%s1486 + $0xe8] sm:$0xff] %v1356
        %1517 = vst [vmem:[%s1486 + $0xf0] sm:$0xff] %v1361
        %1518 = vst [vmem:[%s1486 + $0xf8] sm:$0xff] %v1364
        // Predicated region
        $region33: #{tpu_custom_call.1} parent=27 // pred_check
          %p1519 = pneg %p1367
        $region34: #{tpu_custom_call.1} parent=27 // pred_check_branch
          %1521 = sbr.rel (%p1519) target = $region36
        $region35: #{tpu_custom_call.1} parent=27 // pred_region
          %v1522 = vld [vmem:[#allocation2] sm:$0x1]
          %v1523 = vmul.f32 %v1522, 0.00390625
          %v1524 = vld [vmem:[#allocation3] sm:$0x1]
          %v1525 = vmul.f32 %v1524, 0.00390625
          %v1526 = vmul.f32 %v1523, %v1523
          %v1527 = vsub.f32 %v1525, %v1526
          %v1528 = vadd.f32 %v1527, 1e-05
          %v1529 = vrsqrt.pop %v1528
          %v1530 = vld [vmem:[%s148] sm:$0xff]
          %v1531 = vld [vmem:[%s148 + $0x8] sm:$0xff]
          %v1532 = vld [vmem:[%s148 + $0x10] sm:$0xff]
          %v1533 = vld [vmem:[%s148 + $0x18] sm:$0xff]
          %v1534 = vld [vmem:[%s148 + $0x20] sm:$0xff]
          %v1535 = vld [vmem:[%s148 + $0x28] sm:$0xff]
          %v1536 = vld [vmem:[%s148 + $0x30] sm:$0xff]
          %v1537 = vld [vmem:[%s148 + $0x38] sm:$0xff]
          %v1538 = vld [vmem:[%s148 + $0x40] sm:$0xff]
          %v1539 = vld [vmem:[%s148 + $0x48] sm:$0xff]
          %v1540 = vld [vmem:[%s148 + $0x50] sm:$0xff]
          %v1541 = vld [vmem:[%s148 + $0x58] sm:$0xff]
          %v1542 = vld [vmem:[%s148 + $0x60] sm:$0xff]
          %v1543 = vld [vmem:[%s148 + $0x68] sm:$0xff]
          %v1544 = vld [vmem:[%s148 + $0x70] sm:$0xff]
          %v1545 = vld [vmem:[%s148 + $0x78] sm:$0xff]
          %v1546 = vld [vmem:[%s148 + $0x80] sm:$0xff]
          %v1547 = vld [vmem:[%s148 + $0x88] sm:$0xff]
          %v1548 = vld [vmem:[%s148 + $0x90] sm:$0xff]
          %v1549 = vld [vmem:[%s148 + $0x98] sm:$0xff]
          %v1550 = vld [vmem:[%s148 + $0xa0] sm:$0xff]
          %v1551 = vld [vmem:[%s148 + $0xa8] sm:$0xff]
          %v1552 = vld [vmem:[%s148 + $0xb0] sm:$0xff]
          %v1553 = vld [vmem:[%s148 + $0xb8] sm:$0xff]
          %v1554 = vld [vmem:[%s148 + $0xc0] sm:$0xff]
          %v1555 = vld [vmem:[%s148 + $0xc8] sm:$0xff]
          %v1556 = vld [vmem:[%s148 + $0xd0] sm:$0xff]
          %v1557 = vld [vmem:[%s148 + $0xd8] sm:$0xff]
          %v1558 = vld [vmem:[%s148 + $0xe0] sm:$0xff]
          %v1559 = vld [vmem:[%s148 + $0xe8] sm:$0xff]
          %v1560 = vld [vmem:[%s148 + $0xf0] sm:$0xff]
          %v1561 = vld [vmem:[%s148 + $0xf8] sm:$0xff]
          %v1563 = vlaneseq
          %v1564 = vshrl.u32 %v1563, 7
          %v1565 = vsub.s32 0, %v1564
          %v1566 = vrot.slane %v1523, %v1565
          %v1568 = vsub.f32 %v1530, %v1566
          %v1569 = vsub.f32 %v1531, %v1566
          %v1570 = vsub.f32 %v1532, %v1566
          %v1571 = vsub.f32 %v1533, %v1566
          %v1572 = vsub.f32 %v1534, %v1566
          %v1573 = vsub.f32 %v1535, %v1566
          %v1574 = vsub.f32 %v1536, %v1566
          %v1575 = vsub.f32 %v1537, %v1566
          %v1576 = vsub.f32 %v1538, %v1566
          %v1577 = vsub.f32 %v1539, %v1566
          %v1578 = vsub.f32 %v1540, %v1566
          %v1579 = vsub.f32 %v1541, %v1566
          %v1580 = vsub.f32 %v1542, %v1566
          %v1581 = vsub.f32 %v1543, %v1566
          %v1582 = vsub.f32 %v1544, %v1566
          %v1583 = vsub.f32 %v1545, %v1566
          %v1584 = vsub.f32 %v1546, %v1566
          %v1585 = vsub.f32 %v1547, %v1566
          %v1586 = vsub.f32 %v1548, %v1566
          %v1587 = vsub.f32 %v1549, %v1566
          %v1588 = vsub.f32 %v1550, %v1566
          %v1589 = vsub.f32 %v1551, %v1566
          %v1590 = vsub.f32 %v1552, %v1566
          %v1591 = vsub.f32 %v1553, %v1566
          %v1592 = vsub.f32 %v1554, %v1566
          %v1593 = vsub.f32 %v1555, %v1566
          %v1594 = vsub.f32 %v1556, %v1566
          %v1595 = vsub.f32 %v1557, %v1566
          %v1596 = vsub.f32 %v1558, %v1566
          %v1597 = vsub.f32 %v1559, %v1566
          %v1598 = vsub.f32 %v1560, %v1566
          %v1599 = vsub.f32 %v1561, %v1566
          %v1601 = vlaneseq
          %v1602 = vshrl.u32 %v1601, 7
          %v1603 = vsub.s32 0, %v1602
          %v1604 = vrot.slane %v1529, %v1603
          %v1606 = vmul.f32 %v1568, %v1604
          %v1607 = vmul.f32 %v1569, %v1604
          %v1608 = vmul.f32 %v1570, %v1604
          %v1609 = vmul.f32 %v1571, %v1604
          %v1610 = vmul.f32 %v1572, %v1604
          %v1611 = vmul.f32 %v1573, %v1604
          %v1612 = vmul.f32 %v1574, %v1604
          %v1613 = vmul.f32 %v1575, %v1604
          %v1614 = vmul.f32 %v1576, %v1604
          %v1615 = vmul.f32 %v1577, %v1604
          %v1616 = vmul.f32 %v1578, %v1604
          %v1617 = vmul.f32 %v1579, %v1604
          %v1618 = vmul.f32 %v1580, %v1604
          %v1619 = vmul.f32 %v1581, %v1604
          %v1620 = vmul.f32 %v1582, %v1604
          %v1621 = vmul.f32 %v1583, %v1604
          %v1622 = vmul.f32 %v1584, %v1604
          %v1623 = vmul.f32 %v1585, %v1604
          %v1624 = vmul.f32 %v1586, %v1604
          %v1625 = vmul.f32 %v1587, %v1604
          %v1626 = vmul.f32 %v1588, %v1604
          %v1627 = vmul.f32 %v1589, %v1604
          %v1628 = vmul.f32 %v1590, %v1604
          %v1629 = vmul.f32 %v1591, %v1604
          %v1630 = vmul.f32 %v1592, %v1604
          %v1631 = vmul.f32 %v1593, %v1604
          %v1632 = vmul.f32 %v1594, %v1604
          %v1633 = vmul.f32 %v1595, %v1604
          %v1634 = vmul.f32 %v1596, %v1604
          %v1635 = vmul.f32 %v1597, %v1604
          %v1636 = vmul.f32 %v1598, %v1604
          %v1637 = vmul.f32 %v1599, %v1604
          %v1638 = vmax.f32 %v1606, 0.0
          %v1639 = vmax.f32 %v1607, 0.0
          %v1640 = vmax.f32 %v1608, 0.0
          %v1641 = vmax.f32 %v1609, 0.0
          %v1642 = vmax.f32 %v1610, 0.0
          %v1643 = vmax.f32 %v1611, 0.0
          %v1644 = vmax.f32 %v1612, 0.0
          %v1645 = vmax.f32 %v1613, 0.0
          %v1646 = vmax.f32 %v1614, 0.0
          %v1647 = vmax.f32 %v1615, 0.0
          %v1648 = vmax.f32 %v1616, 0.0
          %v1649 = vmax.f32 %v1617, 0.0
          %v1650 = vmax.f32 %v1618, 0.0
          %v1651 = vmax.f32 %v1619, 0.0
          %v1652 = vmax.f32 %v1620, 0.0
          %v1653 = vmax.f32 %v1621, 0.0
          %v1654 = vmax.f32 %v1622, 0.0
          %v1655 = vmax.f32 %v1623, 0.0
          %v1656 = vmax.f32 %v1624, 0.0
          %v1657 = vmax.f32 %v1625, 0.0
          %v1658 = vmax.f32 %v1626, 0.0
          %v1659 = vmax.f32 %v1627, 0.0
          %v1660 = vmax.f32 %v1628, 0.0
          %v1661 = vmax.f32 %v1629, 0.0
          %v1662 = vmax.f32 %v1630, 0.0
          %v1663 = vmax.f32 %v1631, 0.0
          %v1664 = vmax.f32 %v1632, 0.0
          %v1665 = vmax.f32 %v1633, 0.0
          %v1666 = vmax.f32 %v1634, 0.0
          %v1667 = vmax.f32 %v1635, 0.0
          %v1668 = vmax.f32 %v1636, 0.0
          %v1669 = vmax.f32 %v1637, 0.0
          %1670 = vst [vmem:[%s148] sm:$0xff] %v1638
          %1671 = vst [vmem:[%s148 + $0x8] sm:$0xff] %v1639
          %1672 = vst [vmem:[%s148 + $0x10] sm:$0xff] %v1640
          %1673 = vst [vmem:[%s148 + $0x18] sm:$0xff] %v1641
          %1674 = vst [vmem:[%s148 + $0x20] sm:$0xff] %v1642
          %1675 = vst [vmem:[%s148 + $0x28] sm:$0xff] %v1643
          %1676 = vst [vmem:[%s148 + $0x30] sm:$0xff] %v1644
          %1677 = vst [vmem:[%s148 + $0x38] sm:$0xff] %v1645
          %1678 = vst [vmem:[%s148 + $0x40] sm:$0xff] %v1646
          %1679 = vst [vmem:[%s148 + $0x48] sm:$0xff] %v1647
          %1680 = vst [vmem:[%s148 + $0x50] sm:$0xff] %v1648
          %1681 = vst [vmem:[%s148 + $0x58] sm:$0xff] %v1649
          %1682 = vst [vmem:[%s148 + $0x60] sm:$0xff] %v1650
          %1683 = vst [vmem:[%s148 + $0x68] sm:$0xff] %v1651
          %1684 = vst [vmem:[%s148 + $0x70] sm:$0xff] %v1652
          %1685 = vst [vmem:[%s148 + $0x78] sm:$0xff] %v1653
          %1686 = vst [vmem:[%s148 + $0x80] sm:$0xff] %v1654
          %1687 = vst [vmem:[%s148 + $0x88] sm:$0xff] %v1655
          %1688 = vst [vmem:[%s148 + $0x90] sm:$0xff] %v1656
          %1689 = vst [vmem:[%s148 + $0x98] sm:$0xff] %v1657
          %1690 = vst [vmem:[%s148 + $0xa0] sm:$0xff] %v1658
          %1691 = vst [vmem:[%s148 + $0xa8] sm:$0xff] %v1659
          %1692 = vst [vmem:[%s148 + $0xb0] sm:$0xff] %v1660
          %1693 = vst [vmem:[%s148 + $0xb8] sm:$0xff] %v1661
          %1694 = vst [vmem:[%s148 + $0xc0] sm:$0xff] %v1662
          %1695 = vst [vmem:[%s148 + $0xc8] sm:$0xff] %v1663
          %1696 = vst [vmem:[%s148 + $0xd0] sm:$0xff] %v1664
          %1697 = vst [vmem:[%s148 + $0xd8] sm:$0xff] %v1665
          %1698 = vst [vmem:[%s148 + $0xe0] sm:$0xff] %v1666
          %1699 = vst [vmem:[%s148 + $0xe8] sm:$0xff] %v1667
          %1700 = vst [vmem:[%s148 + $0xf0] sm:$0xff] %v1668
          %1701 = vst [vmem:[%s148 + $0xf8] sm:$0xff] %v1669
        $region36: #{tpu_custom_call.1} parent=27 // pred_fallthru
          _
        %s1702 = sand.u32 %s83, 1
        %s1703 = scalar_lea.sflag [#allocation5], %s1702
        %s1704 = sand.u32 %s83, 1
        %s1705 = smul.addr %s1704, 256
        %s1706 = scalar_lea.vmem [#allocation4], %s1705
        // Predicated region
        $region37: #{tpu_custom_call.1} parent=27 // pred_check
          %p1707 = pneg %p93
        $region38: #{tpu_custom_call.1} parent=27 // pred_check_branch
          %1709 = sbr.rel (%p1707) target = $region40
        $region39: #{tpu_custom_call.1} parent=27 // pred_region
          %s1711 = ssub.s32 4096, 4096
          %1712 = vsyncadd %s1703, %s1711
          %s1713 = smul.addr %s20, 32
          %s1714 = smul.addr %s1713, 128
          %s1715 = scalar_lea.hbm %s2, %s1714
          %s1716 = sshll.u32 %s1706, 4
          %s1717 = int_to_ptr.vmem [resolvable:$true] %s1716
          %1722 = dma.vmem_to_hbm [thread:$0]  %s1717, 4096, %s1715, %s1703, 128, 128, 8
        $region40: #{tpu_custom_call.1} parent=27 // pred_fallthru
          _
      $region28: #{tpu_custom_call.1} parent=5 // pred_fallthru
        _
      %p1723 = scmp.le.s32.totalorder 2, %s11
      // Predicated region
      $region41: #{tpu_custom_call.1} parent=5 // pred_check
        %p1724 = pneg %p1723
      $region42: #{tpu_custom_call.1} parent=5 // pred_check_branch
        %1726 = sbr.rel (%p1724) target = $region44
      $region43: #{tpu_custom_call.1} parent=5 // pred_region
        %s1727 = ssub.s32 %s11, 2
        // Predicated region
        $region45: #{tpu_custom_call.1} parent=43 // pred_check
          %p1728 = pneg %p99
        $region46: #{tpu_custom_call.1} parent=43 // pred_check_branch
          %1730 = sbr.rel (%p1728) target = $region48
        $region47: #{tpu_custom_call.1} parent=43 // pred_region
          %s1731 = sand.u32 %s84, 1
          %s1732 = scalar_lea.sflag [#allocation5], %s1731
          %s1733 = sand.u32 %s84, 1
          %s1734 = smul.addr %s1733, 256
          %s1735 = scalar_lea.vmem [#allocation4], %s1734
          %1736 = dma.done %s1732, 4096
        $region48: #{tpu_custom_call.1} parent=43 // pred_fallthru
          _
      $region44: #{tpu_custom_call.1} parent=5 // pred_fallthru
        _
    $region6: #{tpu_custom_call.1} parent=1 // loop_footer
      %s15 = sadd.s32 1, %s11
    $region7: #{tpu_custom_call.1} parent=1 // loop_footer_branch
      %10 = sbr.rel target = $region3
    $region8: #{tpu_custom_call.1} parent=1 // loop_exit
      _
    %1737 = vsyncpa [#allocation5], 1
    %s1738 = scalar_lea.sflag [#allocation5], 1
    %1739 = vsyncpa %s1738, 1

</llo_original>
